<compile_context>
chip_gen: v7x
topology: tpu7x:2x2x1
jax: 0.10.0
libtpu: 0.0.40
codegen_flags: <defaults>
</compile_context>

<pallas_src>
import math
import functools

import jax
import jax.numpy as jnp
from jax import lax
from jax.experimental import pallas as pl
from jax.experimental.pallas import tpu as pltpu


def _mha_kernel(q_ref, k_ref, v_ref, wq_ref, wk_ref, wv_ref, wo_ref, bo_ref,
                o_ref, *, num_head, d_k):
    # One grid step == one batch element.
    q = q_ref[0]          # (T, D) bf16
    k = k_ref[0]          # (T, D) bf16
    v = v_ref[0]          # (T, D) bf16
    wo = wo_ref[...]      # (D, D) bf16

    # Fused, lane-dense projections for all heads at once: (T, D) @ (D, D).
    # The reference score scale is already folded into wq on the host.
    qh = jnp.dot(q, wq_ref[...], preferred_element_type=jnp.float32).astype(jnp.bfloat16)
    kh = jnp.dot(k, wk_ref[...], preferred_element_type=jnp.float32).astype(jnp.bfloat16)
    vh = jnp.dot(v, wv_ref[...], preferred_element_type=jnp.float32).astype(jnp.bfloat16)

    T = q.shape[0]
    D = wo.shape[0]
    # Initialize the output-projection accumulator with the bias (saves the
    # epilogue add).
    out_acc = jnp.broadcast_to(bo_ref[...], (T, D)).astype(jnp.float32)

    # Contract the last dim of q_h and k_h directly (no explicit transpose).
    dn_qk = (((1,), (1,)), ((), ()))
    for h in range(num_head):                                   # static unrolled loop
        sl = slice(h * d_k, (h + 1) * d_k)
        s = lax.dot_general(qh[:, sl], kh[:, sl], dn_qk,
                            preferred_element_type=jnp.float32)  # (T, T) f32
        # TODO(synk): mask application would go here (before the row-max subtract).
        s = s - jnp.max(s, axis=-1, keepdims=True)
        p = jnp.exp(s)
        p = p * pl.reciprocal(jnp.sum(p, axis=-1, keepdims=True), approx=True)
        head = jnp.dot(p.astype(jnp.bfloat16), vh[:, sl],
                       preferred_element_type=jnp.float32)       # (T, d_k) f32
        # Accumulate straight into the output projection (no concat).
        out_acc = out_acc + jnp.dot(head.astype(jnp.bfloat16), wo[sl, :],
                                    preferred_element_type=jnp.float32)

    o_ref[0] = out_acc.astype(o_ref.dtype)


def multi_head_attention(Q, K, V, wq, wk, wv, wo_t, bo):
    """Q,K,V: (B,T,D) f32; wq/wk/wv: (H,D,d_k) f32 (pre-transposed per-head Linear
    weights); wo_t: (D,D) f32 pre-transposed output Linear weight; bo: (D,) f32."""
    B, T, D = Q.shape
    H, _, d_k = wq.shape
    out_dtype = Q.dtype

    # Fold the reference score scale (k.shape[-1] / sqrt(d_k) == sqrt(d_k)) into Wq.
    scale = jnp.float32(d_k / math.sqrt(d_k))

    # Stack per-head weights lane-contiguously: (H, D, d_k) -> (D, H*d_k) == (D, D).
    wq_all = (jnp.transpose(wq, (1, 0, 2)).reshape(D, H * d_k) * scale).astype(jnp.bfloat16)
    wk_all = jnp.transpose(wk, (1, 0, 2)).reshape(D, H * d_k).astype(jnp.bfloat16)
    wv_all = jnp.transpose(wv, (1, 0, 2)).reshape(D, H * d_k).astype(jnp.bfloat16)
    wo_b = wo_t.astype(jnp.bfloat16)
    bo2 = bo.reshape(1, D).astype(jnp.float32)

    Qb = Q.astype(jnp.bfloat16)
    Kb = K.astype(jnp.bfloat16)
    Vb = V.astype(jnp.bfloat16)

    kernel = functools.partial(_mha_kernel, num_head=H, d_k=d_k)

    grid_spec = pltpu.PrefetchScalarGridSpec(
        num_scalar_prefetch=0,
        grid=(B,),
        in_specs=[
            pl.BlockSpec((1, T, D), lambda b: (b, 0, 0)),   # Q
            pl.BlockSpec((1, T, D), lambda b: (b, 0, 0)),   # K
            pl.BlockSpec((1, T, D), lambda b: (b, 0, 0)),   # V
            pl.BlockSpec((D, D), lambda b: (0, 0)),         # Wq stacked, pre-scaled
            pl.BlockSpec((D, D), lambda b: (0, 0)),         # Wk stacked
            pl.BlockSpec((D, D), lambda b: (0, 0)),         # Wv stacked
            pl.BlockSpec((D, D), lambda b: (0, 0)),         # Wo^T
            pl.BlockSpec((1, D), lambda b: (0, 0)),         # bias
        ],
        out_specs=pl.BlockSpec((1, T, D), lambda b: (b, 0, 0)),
    )

    flops = B * (3 * 2 * T * D * D          # fused Q/K/V projections
                 + H * 2 * T * T * d_k      # scores
                 + H * 2 * T * T * d_k      # p @ v
                 + 2 * T * D * D)           # output projection (accumulated per head)
    transcendentals = B * H * T * T          # exp
    bytes_accessed = (3 * B * T * D * 2      # bf16 Q/K/V
                      + 4 * D * D * 2        # bf16 weights
                      + D * 4                # f32 bias
                      + B * T * D * 4)       # f32 output

    return pl.pallas_call(
        kernel,
        out_shape=jax.ShapeDtypeStruct((B, T, D), out_dtype),
        grid_spec=grid_spec,
        compiler_params=pltpu.CompilerParams(dimension_semantics=("parallel",)),
        cost_estimate=pl.CostEstimate(flops=flops,
                                      transcendentals=transcendentals,
                                      bytes_accessed=bytes_accessed),
    )(Qb, Kb, Vb, wq_all, wk_all, wv_all, wo_b, bo2)


def reference(Q, K, V, wq, wk, wv, wo_t, bo):
    """Plain-JAX f32 reference matching the PyTorch module (eval mode)."""
    H, D, d_k = wq.shape
    outs = []
    for h in range(H):
        q = Q @ wq[h]
        k = K @ wk[h]
        v = V @ wv[h]
        w = (q @ jnp.swapaxes(k, -2, -1)) * (k.shape[-1] / math.sqrt(d_k))
        w = jax.nn.softmax(w, axis=-1)
        outs.append(w @ v)
    concat = jnp.concatenate(outs, axis=-1)
    return concat @ wo_t + bo


if __name__ == "__main__":
    B, T, dmodel, num_head = 2, 8, 32, 4
    d_k = dmodel // num_head

    key = jax.random.PRNGKey(0)
    keys = jax.random.split(key, 8)

    # Deterministic synthetic parameters (shapes match nn.Linear weights).
    # Per-head Linear(dmodel, d_k, bias=False) weight is (d_k, dmodel) in torch;
    # stored pre-transposed and stacked: (num_head, dmodel, d_k).
    wq = jax.random.normal(keys[0], (num_head, dmodel, d_k), jnp.float32) * 0.1
    wk = jax.random.normal(keys[1], (num_head, dmodel, d_k), jnp.float32) * 0.1
    wv = jax.random.normal(keys[2], (num_head, dmodel, d_k), jnp.float32) * 0.1
    # Output Linear(dmodel, dmodel): torch weight is (dmodel, dmodel); store W^T.
    wo_t = jax.random.normal(keys[3], (dmodel, dmodel), jnp.float32) * 0.1
    bo = jax.random.normal(keys[4], (dmodel,), jnp.float32) * 0.1

    Q = jax.random.normal(keys[5], (B, T, dmodel), jnp.float32)
    K = jax.random.normal(keys[6], (B, T, dmodel), jnp.float32)
    V = jax.random.normal(keys[7], (B, T, dmodel), jnp.float32)

    out = multi_head_attention(Q, K, V, wq, wk, wv, wo_t, bo)
    out = jax.block_until_ready(out)

    ref = reference(Q, K, V, wq, wk, wv, wo_t, bo)
    assert out.shape == (B, T, dmodel)
    # Tolerance is relaxed vs. the pure-f32 version because MXU operands are bf16
    # (accumulation and softmax remain f32); structural errors would be >> 5e-2.
    assert jnp.allclose(out, ref, atol=5e-2, rtol=5e-2), "mismatch vs reference"

    print("KERNEL_OK")
</pallas_src>

<mosaic_0001>
module attributes {stable_mosaic.version = 11 : i64} {
  func.func @_mha_kernel(%arg0: i32, %arg1: memref<1x8x32xbf16, #tpu.memory_space<vmem>>, %arg2: memref<1x8x32xbf16, #tpu.memory_space<vmem>>, %arg3: memref<1x8x32xbf16, #tpu.memory_space<vmem>>, %arg4: memref<32x32xbf16, #tpu.memory_space<vmem>>, %arg5: memref<32x32xbf16, #tpu.memory_space<vmem>>, %arg6: memref<32x32xbf16, #tpu.memory_space<vmem>>, %arg7: memref<32x32xbf16, #tpu.memory_space<vmem>>, %arg8: memref<1x32xf32, #tpu.memory_space<vmem>>, %arg9: memref<1x8x32xf32, #tpu.memory_space<vmem>>) attributes {dimension_semantics = [#tpu.dimension_semantics<parallel>], iteration_bounds = array<i64: 2>, scalar_prefetch = 0 : i64, scratch_operands = 0 : i64, tpu.core_type = #tpu.core_type<tc>, window_params = [{transform_indices = @transform_0, window_bounds = array<i64: 1, 8, 32>}, {transform_indices = @transform_1, window_bounds = array<i64: 1, 8, 32>}, {transform_indices = @transform_2, window_bounds = array<i64: 1, 8, 32>}, {pipeline_mode = #tpu.pipeline_mode<synchronous>, transform_indices = @transform_3, window_bounds = array<i64: 32, 32>}, {pipeline_mode = #tpu.pipeline_mode<synchronous>, transform_indices = @transform_4, window_bounds = array<i64: 32, 32>}, {pipeline_mode = #tpu.pipeline_mode<synchronous>, transform_indices = @transform_5, window_bounds = array<i64: 32, 32>}, {pipeline_mode = #tpu.pipeline_mode<synchronous>, transform_indices = @transform_6, window_bounds = array<i64: 32, 32>}, {pipeline_mode = #tpu.pipeline_mode<synchronous>, transform_indices = @transform_7, window_bounds = array<i64: 1, 32>}, {transform_indices = @transform_8, window_bounds = array<i64: 1, 8, 32>}]} {
    %c0 = arith.constant 0 : index
    %c0_0 = arith.constant 0 : index
    %c0_1 = arith.constant 0 : index
    %0 = vector.load %arg1[%c0, %c0_0, %c0_1] : memref<1x8x32xbf16, #tpu.memory_space<vmem>>, vector<1x8x32xbf16>
    %1 = vector.shape_cast %0 : vector<1x8x32xbf16> to vector<8x32xbf16>
    %c0_2 = arith.constant 0 : index
    %c0_3 = arith.constant 0 : index
    %c0_4 = arith.constant 0 : index
    %2 = vector.load %arg2[%c0_2, %c0_3, %c0_4] : memref<1x8x32xbf16, #tpu.memory_space<vmem>>, vector<1x8x32xbf16>
    %3 = vector.shape_cast %2 : vector<1x8x32xbf16> to vector<8x32xbf16>
    %c0_5 = arith.constant 0 : index
    %c0_6 = arith.constant 0 : index
    %c0_7 = arith.constant 0 : index
    %4 = vector.load %arg3[%c0_5, %c0_6, %c0_7] : memref<1x8x32xbf16, #tpu.memory_space<vmem>>, vector<1x8x32xbf16>
    %5 = vector.shape_cast %4 : vector<1x8x32xbf16> to vector<8x32xbf16>
    %c0_8 = arith.constant 0 : index
    %c0_9 = arith.constant 0 : index
    %6 = vector.load %arg7[%c0_8, %c0_9] : memref<32x32xbf16, #tpu.memory_space<vmem>>, vector<32x32xbf16>
    %c0_10 = arith.constant 0 : index
    %c0_11 = arith.constant 0 : index
    %7 = vector.load %arg4[%c0_10, %c0_11] : memref<32x32xbf16, #tpu.memory_space<vmem>>, vector<32x32xbf16>
    %cst = arith.constant dense<0.000000e+00> : vector<8x32xf32>
    %8 = tpu.matmul %1, %7, %cst {dimension_numbers = #tpu.dot_dimension_numbers<[1], [0], [0], [1], [0, 0, 1, 1], [], []>} : vector<8x32xbf16>, vector<32x32xbf16>, vector<8x32xf32> -> vector<8x32xf32>
    %9 = arith.truncf %8 : vector<8x32xf32> to vector<8x32xbf16>
    %c0_12 = arith.constant 0 : index
    %c0_13 = arith.constant 0 : index
    %10 = vector.load %arg5[%c0_12, %c0_13] : memref<32x32xbf16, #tpu.memory_space<vmem>>, vector<32x32xbf16>
    %cst_14 = arith.constant dense<0.000000e+00> : vector<8x32xf32>
    %11 = tpu.matmul %3, %10, %cst_14 {dimension_numbers = #tpu.dot_dimension_numbers<[1], [0], [0], [1], [0, 0, 1, 1], [], []>} : vector<8x32xbf16>, vector<32x32xbf16>, vector<8x32xf32> -> vector<8x32xf32>
    %12 = arith.truncf %11 : vector<8x32xf32> to vector<8x32xbf16>
    %c0_15 = arith.constant 0 : index
    %c0_16 = arith.constant 0 : index
    %13 = vector.load %arg6[%c0_15, %c0_16] : memref<32x32xbf16, #tpu.memory_space<vmem>>, vector<32x32xbf16>
    %cst_17 = arith.constant dense<0.000000e+00> : vector<8x32xf32>
    %14 = tpu.matmul %5, %13, %cst_17 {dimension_numbers = #tpu.dot_dimension_numbers<[1], [0], [0], [1], [0, 0, 1, 1], [], []>} : vector<8x32xbf16>, vector<32x32xbf16>, vector<8x32xf32> -> vector<8x32xf32>
    %15 = arith.truncf %14 : vector<8x32xf32> to vector<8x32xbf16>
    %c0_18 = arith.constant 0 : index
    %c0_19 = arith.constant 0 : index
    %16 = vector.load %arg8[%c0_18, %c0_19] : memref<1x32xf32, #tpu.memory_space<vmem>>, vector<1x32xf32>
    %17 = vector.shape_cast %16 : vector<1x32xf32> to vector<1x32xf32>
    %18 = vector.broadcast %17 : vector<1x32xf32> to vector<8x32xf32>
    %19 = vector.extract_strided_slice %9 {offsets = [0, 0], sizes = [8, 8], strides = [1, 1]} : vector<8x32xbf16> to vector<8x8xbf16>
    %20 = vector.extract_strided_slice %12 {offsets = [0, 0], sizes = [8, 8], strides = [1, 1]} : vector<8x32xbf16> to vector<8x8xbf16>
    %cst_20 = arith.constant dense<0.000000e+00> : vector<8x8xf32>
    %21 = tpu.matmul %19, %20, %cst_20 {dimension_numbers = #tpu.dot_dimension_numbers<[1], [1], [0], [0], [0, 0, 1, 0], [], []>} : vector<8x8xbf16>, vector<8x8xbf16>, vector<8x8xf32> -> vector<8x8xf32>
    %cst_21 = arith.constant dense<0xFF800000> : vector<8xf32>
    %22 = vector.multi_reduction <maximumf>, %21, %cst_21 [1] : vector<8x8xf32> to vector<8xf32>
    %23 = vector.shape_cast %22 : vector<8xf32> to vector<8x1xf32>
    %24 = vector.broadcast %23 : vector<8x1xf32> to vector<8x8xf32>
    %25 = arith.subf %21, %24 : vector<8x8xf32>
    %26 = math.exp %25 : vector<8x8xf32>
    %cst_22 = arith.constant dense<0.000000e+00> : vector<8xf32>
    %27 = vector.multi_reduction <add>, %26, %cst_22 [1] : vector<8x8xf32> to vector<8xf32>
    %28 = vector.shape_cast %27 : vector<8xf32> to vector<8x1xf32>
    %29 = tpu.reciprocal %28 {approx = true} : vector<8x1xf32> -> vector<8x1xf32>
    %30 = vector.broadcast %29 : vector<8x1xf32> to vector<8x8xf32>
    %31 = arith.mulf %26, %30 : vector<8x8xf32>
    %32 = arith.truncf %31 : vector<8x8xf32> to vector<8x8xbf16>
    %33 = vector.extract_strided_slice %15 {offsets = [0, 0], sizes = [8, 8], strides = [1, 1]} : vector<8x32xbf16> to vector<8x8xbf16>
    %cst_23 = arith.constant dense<0.000000e+00> : vector<8x8xf32>
    %34 = tpu.matmul %32, %33, %cst_23 {dimension_numbers = #tpu.dot_dimension_numbers<[1], [0], [0], [1], [0, 0, 1, 1], [], []>} : vector<8x8xbf16>, vector<8x8xbf16>, vector<8x8xf32> -> vector<8x8xf32>
    %35 = arith.truncf %34 : vector<8x8xf32> to vector<8x8xbf16>
    %36 = vector.extract_strided_slice %6 {offsets = [0, 0], sizes = [8, 32], strides = [1, 1]} : vector<32x32xbf16> to vector<8x32xbf16>
    %cst_24 = arith.constant dense<0.000000e+00> : vector<8x32xf32>
    %37 = tpu.matmul %35, %36, %cst_24 {dimension_numbers = #tpu.dot_dimension_numbers<[1], [0], [0], [1], [0, 0, 1, 1], [], []>} : vector<8x8xbf16>, vector<8x32xbf16>, vector<8x32xf32> -> vector<8x32xf32>
    %38 = arith.addf %18, %37 : vector<8x32xf32>
    %39 = vector.extract_strided_slice %9 {offsets = [0, 8], sizes = [8, 8], strides = [1, 1]} : vector<8x32xbf16> to vector<8x8xbf16>
    %40 = vector.extract_strided_slice %12 {offsets = [0, 8], sizes = [8, 8], strides = [1, 1]} : vector<8x32xbf16> to vector<8x8xbf16>
    %cst_25 = arith.constant dense<0.000000e+00> : vector<8x8xf32>
    %41 = tpu.matmul %39, %40, %cst_25 {dimension_numbers = #tpu.dot_dimension_numbers<[1], [1], [0], [0], [0, 0, 1, 0], [], []>} : vector<8x8xbf16>, vector<8x8xbf16>, vector<8x8xf32> -> vector<8x8xf32>
    %cst_26 = arith.constant dense<0xFF800000> : vector<8xf32>
    %42 = vector.multi_reduction <maximumf>, %41, %cst_26 [1] : vector<8x8xf32> to vector<8xf32>
    %43 = vector.shape_cast %42 : vector<8xf32> to vector<8x1xf32>
    %44 = vector.broadcast %43 : vector<8x1xf32> to vector<8x8xf32>
    %45 = arith.subf %41, %44 : vector<8x8xf32>
    %46 = math.exp %45 : vector<8x8xf32>
    %cst_27 = arith.constant dense<0.000000e+00> : vector<8xf32>
    %47 = vector.multi_reduction <add>, %46, %cst_27 [1] : vector<8x8xf32> to vector<8xf32>
    %48 = vector.shape_cast %47 : vector<8xf32> to vector<8x1xf32>
    %49 = tpu.reciprocal %48 {approx = true} : vector<8x1xf32> -> vector<8x1xf32>
    %50 = vector.broadcast %49 : vector<8x1xf32> to vector<8x8xf32>
    %51 = arith.mulf %46, %50 : vector<8x8xf32>
    %52 = arith.truncf %51 : vector<8x8xf32> to vector<8x8xbf16>
    %53 = vector.extract_strided_slice %15 {offsets = [0, 8], sizes = [8, 8], strides = [1, 1]} : vector<8x32xbf16> to vector<8x8xbf16>
    %cst_28 = arith.constant dense<0.000000e+00> : vector<8x8xf32>
    %54 = tpu.matmul %52, %53, %cst_28 {dimension_numbers = #tpu.dot_dimension_numbers<[1], [0], [0], [1], [0, 0, 1, 1], [], []>} : vector<8x8xbf16>, vector<8x8xbf16>, vector<8x8xf32> -> vector<8x8xf32>
    %55 = arith.truncf %54 : vector<8x8xf32> to vector<8x8xbf16>
    %56 = vector.extract_strided_slice %6 {offsets = [8, 0], sizes = [8, 32], strides = [1, 1]} : vector<32x32xbf16> to vector<8x32xbf16>
    %cst_29 = arith.constant dense<0.000000e+00> : vector<8x32xf32>
    %57 = tpu.matmul %55, %56, %cst_29 {dimension_numbers = #tpu.dot_dimension_numbers<[1], [0], [0], [1], [0, 0, 1, 1], [], []>} : vector<8x8xbf16>, vector<8x32xbf16>, vector<8x32xf32> -> vector<8x32xf32>
    %58 = arith.addf %38, %57 : vector<8x32xf32>
    %59 = vector.extract_strided_slice %9 {offsets = [0, 16], sizes = [8, 8], strides = [1, 1]} : vector<8x32xbf16> to vector<8x8xbf16>
    %60 = vector.extract_strided_slice %12 {offsets = [0, 16], sizes = [8, 8], strides = [1, 1]} : vector<8x32xbf16> to vector<8x8xbf16>
    %cst_30 = arith.constant dense<0.000000e+00> : vector<8x8xf32>
    %61 = tpu.matmul %59, %60, %cst_30 {dimension_numbers = #tpu.dot_dimension_numbers<[1], [1], [0], [0], [0, 0, 1, 0], [], []>} : vector<8x8xbf16>, vector<8x8xbf16>, vector<8x8xf32> -> vector<8x8xf32>
    %cst_31 = arith.constant dense<0xFF800000> : vector<8xf32>
    %62 = vector.multi_reduction <maximumf>, %61, %cst_31 [1] : vector<8x8xf32> to vector<8xf32>
    %63 = vector.shape_cast %62 : vector<8xf32> to vector<8x1xf32>
    %64 = vector.broadcast %63 : vector<8x1xf32> to vector<8x8xf32>
    %65 = arith.subf %61, %64 : vector<8x8xf32>
    %66 = math.exp %65 : vector<8x8xf32>
    %cst_32 = arith.constant dense<0.000000e+00> : vector<8xf32>
    %67 = vector.multi_reduction <add>, %66, %cst_32 [1] : vector<8x8xf32> to vector<8xf32>
    %68 = vector.shape_cast %67 : vector<8xf32> to vector<8x1xf32>
    %69 = tpu.reciprocal %68 {approx = true} : vector<8x1xf32> -> vector<8x1xf32>
    %70 = vector.broadcast %69 : vector<8x1xf32> to vector<8x8xf32>
    %71 = arith.mulf %66, %70 : vector<8x8xf32>
    %72 = arith.truncf %71 : vector<8x8xf32> to vector<8x8xbf16>
    %73 = vector.extract_strided_slice %15 {offsets = [0, 16], sizes = [8, 8], strides = [1, 1]} : vector<8x32xbf16> to vector<8x8xbf16>
    %cst_33 = arith.constant dense<0.000000e+00> : vector<8x8xf32>
    %74 = tpu.matmul %72, %73, %cst_33 {dimension_numbers = #tpu.dot_dimension_numbers<[1], [0], [0], [1], [0, 0, 1, 1], [], []>} : vector<8x8xbf16>, vector<8x8xbf16>, vector<8x8xf32> -> vector<8x8xf32>
    %75 = arith.truncf %74 : vector<8x8xf32> to vector<8x8xbf16>
    %76 = vector.extract_strided_slice %6 {offsets = [16, 0], sizes = [8, 32], strides = [1, 1]} : vector<32x32xbf16> to vector<8x32xbf16>
    %cst_34 = arith.constant dense<0.000000e+00> : vector<8x32xf32>
    %77 = tpu.matmul %75, %76, %cst_34 {dimension_numbers = #tpu.dot_dimension_numbers<[1], [0], [0], [1], [0, 0, 1, 1], [], []>} : vector<8x8xbf16>, vector<8x32xbf16>, vector<8x32xf32> -> vector<8x32xf32>
    %78 = arith.addf %58, %77 : vector<8x32xf32>
    %79 = vector.extract_strided_slice %9 {offsets = [0, 24], sizes = [8, 8], strides = [1, 1]} : vector<8x32xbf16> to vector<8x8xbf16>
    %80 = vector.extract_strided_slice %12 {offsets = [0, 24], sizes = [8, 8], strides = [1, 1]} : vector<8x32xbf16> to vector<8x8xbf16>
    %cst_35 = arith.constant dense<0.000000e+00> : vector<8x8xf32>
    %81 = tpu.matmul %79, %80, %cst_35 {dimension_numbers = #tpu.dot_dimension_numbers<[1], [1], [0], [0], [0, 0, 1, 0], [], []>} : vector<8x8xbf16>, vector<8x8xbf16>, vector<8x8xf32> -> vector<8x8xf32>
    %cst_36 = arith.constant dense<0xFF800000> : vector<8xf32>
    %82 = vector.multi_reduction <maximumf>, %81, %cst_36 [1] : vector<8x8xf32> to vector<8xf32>
    %83 = vector.shape_cast %82 : vector<8xf32> to vector<8x1xf32>
    %84 = vector.broadcast %83 : vector<8x1xf32> to vector<8x8xf32>
    %85 = arith.subf %81, %84 : vector<8x8xf32>
    %86 = math.exp %85 : vector<8x8xf32>
    %cst_37 = arith.constant dense<0.000000e+00> : vector<8xf32>
    %87 = vector.multi_reduction <add>, %86, %cst_37 [1] : vector<8x8xf32> to vector<8xf32>
    %88 = vector.shape_cast %87 : vector<8xf32> to vector<8x1xf32>
    %89 = tpu.reciprocal %88 {approx = true} : vector<8x1xf32> -> vector<8x1xf32>
    %90 = vector.broadcast %89 : vector<8x1xf32> to vector<8x8xf32>
    %91 = arith.mulf %86, %90 : vector<8x8xf32>
    %92 = arith.truncf %91 : vector<8x8xf32> to vector<8x8xbf16>
    %93 = vector.extract_strided_slice %15 {offsets = [0, 24], sizes = [8, 8], strides = [1, 1]} : vector<8x32xbf16> to vector<8x8xbf16>
    %cst_38 = arith.constant dense<0.000000e+00> : vector<8x8xf32>
    %94 = tpu.matmul %92, %93, %cst_38 {dimension_numbers = #tpu.dot_dimension_numbers<[1], [0], [0], [1], [0, 0, 1, 1], [], []>} : vector<8x8xbf16>, vector<8x8xbf16>, vector<8x8xf32> -> vector<8x8xf32>
    %95 = arith.truncf %94 : vector<8x8xf32> to vector<8x8xbf16>
    %96 = vector.extract_strided_slice %6 {offsets = [24, 0], sizes = [8, 32], strides = [1, 1]} : vector<32x32xbf16> to vector<8x32xbf16>
    %cst_39 = arith.constant dense<0.000000e+00> : vector<8x32xf32>
    %97 = tpu.matmul %95, %96, %cst_39 {dimension_numbers = #tpu.dot_dimension_numbers<[1], [0], [0], [1], [0, 0, 1, 1], [], []>} : vector<8x8xbf16>, vector<8x32xbf16>, vector<8x32xf32> -> vector<8x32xf32>
    %98 = arith.addf %78, %97 : vector<8x32xf32>
    %c0_40 = arith.constant 0 : index
    %c0_41 = arith.constant 0 : index
    %c0_42 = arith.constant 0 : index
    %99 = vector.load %arg9[%c0_40, %c0_41, %c0_42] : memref<1x8x32xf32, #tpu.memory_space<vmem>>, vector<1x8x32xf32>
    %100 = vector.shape_cast %99 : vector<1x8x32xf32> to vector<8x32xf32>
    %101 = vector.shape_cast %98 : vector<8x32xf32> to vector<1x8x32xf32>
    tpu.vector_store %arg9[%c0_40, %c0_41, %c0_42], %101 {strides = array<i32>} : memref<1x8x32xf32, #tpu.memory_space<vmem>>, vector<1x8x32xf32>,
    return
  }
  func.func @transform_0(%arg0: i32) -> (i32, i32, i32) {
    %c0_i32 = arith.constant 0 : i32
    %c0_i32_0 = arith.constant 0 : i32
    %c0_i32_1 = arith.constant 0 : i32
    return %arg0, %c0_i32, %c0_i32_0 : i32, i32, i32
  }
  func.func @transform_1(%arg0: i32) -> (i32, i32, i32) {
    %c0_i32 = arith.constant 0 : i32
    %c0_i32_0 = arith.constant 0 : i32
    %c0_i32_1 = arith.constant 0 : i32
    return %arg0, %c0_i32, %c0_i32_0 : i32, i32, i32
  }
  func.func @transform_2(%arg0: i32) -> (i32, i32, i32) {
    %c0_i32 = arith.constant 0 : i32
    %c0_i32_0 = arith.constant 0 : i32
    %c0_i32_1 = arith.constant 0 : i32
    return %arg0, %c0_i32, %c0_i32_0 : i32, i32, i32
  }
  func.func @transform_3(%arg0: i32) -> (i32, i32) {
    %c0_i32 = arith.constant 0 : i32
    %c0_i32_0 = arith.constant 0 : i32
    %c0_i32_1 = arith.constant 0 : i32
    return %c0_i32, %c0_i32_0 : i32, i32
  }
  func.func @transform_4(%arg0: i32) -> (i32, i32) {
    %c0_i32 = arith.constant 0 : i32
    %c0_i32_0 = arith.constant 0 : i32
    %c0_i32_1 = arith.constant 0 : i32
    return %c0_i32, %c0_i32_0 : i32, i32
  }
  func.func @transform_5(%arg0: i32) -> (i32, i32) {
    %c0_i32 = arith.constant 0 : i32
    %c0_i32_0 = arith.constant 0 : i32
    %c0_i32_1 = arith.constant 0 : i32
    return %c0_i32, %c0_i32_0 : i32, i32
  }
  func.func @transform_6(%arg0: i32) -> (i32, i32) {
    %c0_i32 = arith.constant 0 : i32
    %c0_i32_0 = arith.constant 0 : i32
    %c0_i32_1 = arith.constant 0 : i32
    return %c0_i32, %c0_i32_0 : i32, i32
  }
  func.func @transform_7(%arg0: i32) -> (i32, i32) {
    %c0_i32 = arith.constant 0 : i32
    %c0_i32_0 = arith.constant 0 : i32
    %c0_i32_1 = arith.constant 0 : i32
    return %c0_i32, %c0_i32_0 : i32, i32
  }
  func.func @transform_8(%arg0: i32) -> (i32, i32, i32) {
    %c0_i32 = arith.constant 0 : i32
    %c0_i32_0 = arith.constant 0 : i32
    %c0_i32_1 = arith.constant 0 : i32
    return %arg0, %c0_i32, %c0_i32_0 : i32, i32, i32
  }
}

</mosaic_0001>

<llo_original>
// kernel: tpu_custom_call.1
$region0: #{tpu_custom_call.1}
  #allocation0 [shape = 'u32[]', space=smem, size = 0x4, offset = 0x4, fixed_abs, tag = 'smem constant byte address 0x4 - core index']
  #allocation1 [shape = 'u32[144,128]{1,0:T(1,128)}', space=vmem, size = 0x12000, scoped, tag = 'internal scratch']
  %s0 = inlined_call_operand.hbm [shape: bf16[2,8,32], index: 0, kind: input, shape index: {}]
  %s1 = inlined_call_operand.hbm [shape: bf16[2,8,32], index: 1, kind: input, shape index: {}]
  %s2 = inlined_call_operand.hbm [shape: bf16[2,8,32], index: 2, kind: input, shape index: {}]
  %s3 = inlined_call_operand.hbm [shape: bf16[32,32], index: 3, kind: input, shape index: {}]
  %s4 = inlined_call_operand.hbm [shape: bf16[32,32], index: 4, kind: input, shape index: {}]
  %s5 = inlined_call_operand.vmem [shape: bf16[32,32], index: 5, kind: input, shape index: {}]
  %s6 = inlined_call_operand.hbm [shape: bf16[32,32], index: 6, kind: input, shape index: {}]
  %s7 = inlined_call_operand.vmem [shape: f32[1,32], index: 7, kind: input, shape index: {}]
  %s8 = inlined_call_operand.hbm [shape: f32[2,8,32], index: 8, kind: output, shape index: {}]
  %s9 = sld [smem:[#allocation0]]
  $region89: #{tpu_custom_call.1} parent=0
    _
  %s11 = ssub.s32 1, %s9
  %s12 = scalar_select 0, %s11, %s9
  $region1: #{tpu_custom_call.1} parent=0
    #allocation2 [shape = 'u8[4096]{0}', space=vmem, size = 0x1000, scoped, tag = 'input window, operand 0']
    #allocation3 [shape = 's32[2]{0}', space=sflag, size = 0x8, scoped, tag = 'scoped memory for tpu_custom_call.1']
    #allocation4 [shape = 's32[2]{0}', space=sflag, size = 0x8, scoped, tag = 'scoped memory for tpu_custom_call.1']
    #allocation5 [shape = 'u8[4096]{0}', space=vmem, size = 0x1000, scoped, tag = 'input window, operand 1']
    #allocation6 [shape = 's32[2]{0}', space=sflag, size = 0x8, scoped, tag = 'scoped memory for tpu_custom_call.1']
    #allocation7 [shape = 'u8[4096]{0}', space=vmem, size = 0x1000, scoped, tag = 'input window, operand 2']
    #allocation8 [shape = 'u8[8192]{0}', space=vmem, size = 0x2000, scoped, tag = 'input window, operand 3, single buffered']
    #allocation9 [shape = 's32[1]{0}', space=sflag, size = 0x4, scoped, tag = 'scoped memory for tpu_custom_call.1']
    #allocation10 [shape = 'u8[8192]{0}', space=vmem, size = 0x2000, scoped, tag = 'input window, operand 4, single buffered']
    #allocation11 [shape = 'u8[8192]{0}', space=vmem, size = 0x2000, scoped, tag = 'input window, operand 6, single buffered']
    #allocation12 [shape = 's32[1]{0}', space=sflag, size = 0x4, scoped, tag = 'scoped memory for tpu_custom_call.1']
    #allocation13 [shape = 'u8[8192]{0}', space=vmem, size = 0x2000, scoped, tag = 'output window, operand 0']
    %13 = vsyncpa [#allocation3], 0
    %s14 = scalar_lea.sflag [#allocation3], 1
    %15 = vsyncpa %s14, 0
    %16 = vsyncpa [#allocation6], 0
    %s17 = scalar_lea.sflag [#allocation6], 1
    %18 = vsyncpa %s17, 0
    %19 = vsyncpa [#allocation9], 0
    %20 = vsyncpa [#allocation12], 0
    %21 = vsyncpa [#allocation4], 0
    %s22 = scalar_lea.sflag [#allocation4], 1
    %23 = vsyncpa %s22, 0
    loop: start=0, step=1, limit=4
    $region2: #{tpu_custom_call.1} parent=1 // loop_pre_header
      _
    $region3: #{tpu_custom_call.1} parent=1 // loop_header
      %s25 = sphi 0, %s29
      %p26 = scmp.ge.s32.totalorder %s25, 4
      %s35 = sphi 0, %s37
      %s38 = sphi 0, %s35
      %s39 = sphi 0, %s38
      %s55 = sphi 0, %s39
      %s61 = sphi 0, %s63
      %s64 = sphi 0, %s61
      %s65 = sphi 0, %s64
      %s81 = sphi 0, %s65
      %s87 = sphi 0, %s89
      %s90 = sphi 0, %s87
      %s91 = sphi 0, %s90
      %s107 = sphi 0, %s91
      %s111 = sphi 0, %s111
      %s113 = sphi 0, %s111
      %s114 = sphi 0, %s113
      %s128 = sphi 0, %s114
      %s132 = sphi 0, %s132
      %s134 = sphi 0, %s132
      %s135 = sphi 0, %s134
      %s149 = sphi 0, %s135
      %s153 = sphi 0, %s153
      %s155 = sphi 0, %s153
      %s156 = sphi 0, %s155
      %s170 = sphi 0, %s156
      %s174 = sphi 0, %s174
      %s176 = sphi 0, %s174
      %s177 = sphi 0, %s176
      %s191 = sphi 0, %s177
      %s195 = sphi 0, %s195
      %s197 = sphi 0, %s195
      %s198 = sphi 0, %s197
      %s212 = sphi 0, %s198
      %s218 = sphi 0, %s220
      %s221 = sphi 0, %s218
      %s222 = sphi 0, %s221
      %s238 = sphi 0, %s222
    $region4: #{tpu_custom_call.1} parent=1 // loop_header_branch
      %28 = sbr.rel (%p26) target = $region8
    $region5: #{tpu_custom_call.1} parent=1 // loop_body
      %s30 = ssub.s32 %s25, 1
      %s31 = ssub.s32 %s25, 2
      %s32 = sadd.s32 %s25, 1
      %s33 = ssub.s32 %s25, %s32
      %p34 = scmp.eq.s32.totalorder %s33, 0
      %s36 = sadd.s32 %s35, 1
      %s37 = scalar_select %p34, %s35, %s36
      %p40 = pneg %p34
      %p41 = scmp.eq.s32.totalorder %s25, 1
      %p42 = por %p40, %p41
      %p43 = scmp.ne.s32.totalorder %s35, %s38
      %p44 = scmp.eq.s32.totalorder %s25, 0
      %p45 = por %p43, %p44
      %p46 = scmp.ne.s32.totalorder %s35, %s38
      %p47 = scmp.eq.s32.totalorder %s30, 1
      %p48 = por %p46, %p47
      %p49 = scmp.ne.s32.totalorder %s38, %s39
      %p50 = scmp.eq.s32.totalorder %s30, 0
      %p51 = por %p49, %p50
      %p52 = scmp.ne.s32.totalorder %s38, %s39
      %p53 = scmp.eq.s32.totalorder %s31, 1
      %p54 = por %p52, %p53
      %p56 = scmp.ne.s32.totalorder %s39, %s55
      %p57 = scmp.eq.s32.totalorder %s31, 0
      %p58 = por %p56, %p57
      %s59 = ssub.s32 %s25, %s32
      %p60 = scmp.eq.s32.totalorder %s59, 0
      %s62 = sadd.s32 %s61, 1
      %s63 = scalar_select %p60, %s61, %s62
      %p66 = pneg %p60
      %p67 = scmp.eq.s32.totalorder %s25, 1
      %p68 = por %p66, %p67
      %p69 = scmp.ne.s32.totalorder %s61, %s64
      %p70 = scmp.eq.s32.totalorder %s25, 0
      %p71 = por %p69, %p70
      %p72 = scmp.ne.s32.totalorder %s61, %s64
      %p73 = scmp.eq.s32.totalorder %s30, 1
      %p74 = por %p72, %p73
      %p75 = scmp.ne.s32.totalorder %s64, %s65
      %p76 = scmp.eq.s32.totalorder %s30, 0
      %p77 = por %p75, %p76
      %p78 = scmp.ne.s32.totalorder %s64, %s65
      %p79 = scmp.eq.s32.totalorder %s31, 1
      %p80 = por %p78, %p79
      %p82 = scmp.ne.s32.totalorder %s65, %s81
      %p83 = scmp.eq.s32.totalorder %s31, 0
      %p84 = por %p82, %p83
      %s85 = ssub.s32 %s25, %s32
      %p86 = scmp.eq.s32.totalorder %s85, 0
      %s88 = sadd.s32 %s87, 1
      %s89 = scalar_select %p86, %s87, %s88
      %p92 = pneg %p86
      %p93 = scmp.eq.s32.totalorder %s25, 1
      %p94 = por %p92, %p93
      %p95 = scmp.ne.s32.totalorder %s87, %s90
      %p96 = scmp.eq.s32.totalorder %s25, 0
      %p97 = por %p95, %p96
      %p98 = scmp.ne.s32.totalorder %s87, %s90
      %p99 = scmp.eq.s32.totalorder %s30, 1
      %p100 = por %p98, %p99
      %p101 = scmp.ne.s32.totalorder %s90, %s91
      %p102 = scmp.eq.s32.totalorder %s30, 0
      %p103 = por %p101, %p102
      %p104 = scmp.ne.s32.totalorder %s90, %s91
      %p105 = scmp.eq.s32.totalorder %s31, 1
      %p106 = por %p104, %p105
      %p108 = scmp.ne.s32.totalorder %s91, %s107
      %p109 = scmp.eq.s32.totalorder %s31, 0
      %p110 = por %p108, %p109
      %s112 = sadd.s32 %s111, 1
      %p115 = scmp.eq.s32.totalorder %s25, 1
      %p116 = scmp.ne.s32.totalorder %s111, %s113
      %p117 = scmp.eq.s32.totalorder %s25, 0
      %p118 = por %p116, %p117
      %p119 = scmp.ne.s32.totalorder %s111, %s113
      %p120 = scmp.eq.s32.totalorder %s30, 1
      %p121 = por %p119, %p120
      %p122 = scmp.ne.s32.totalorder %s113, %s114
      %p123 = scmp.eq.s32.totalorder %s30, 0
      %p124 = por %p122, %p123
      %p125 = scmp.ne.s32.totalorder %s113, %s114
      %p126 = scmp.eq.s32.totalorder %s31, 1
      %p127 = por %p125, %p126
      %p129 = scmp.ne.s32.totalorder %s114, %s128
      %p130 = scmp.eq.s32.totalorder %s31, 0
      %p131 = por %p129, %p130
      %s133 = sadd.s32 %s132, 1
      %p136 = scmp.eq.s32.totalorder %s25, 1
      %p137 = scmp.ne.s32.totalorder %s132, %s134
      %p138 = scmp.eq.s32.totalorder %s25, 0
      %p139 = por %p137, %p138
      %p140 = scmp.ne.s32.totalorder %s132, %s134
      %p141 = scmp.eq.s32.totalorder %s30, 1
      %p142 = por %p140, %p141
      %p143 = scmp.ne.s32.totalorder %s134, %s135
      %p144 = scmp.eq.s32.totalorder %s30, 0
      %p145 = por %p143, %p144
      %p146 = scmp.ne.s32.totalorder %s134, %s135
      %p147 = scmp.eq.s32.totalorder %s31, 1
      %p148 = por %p146, %p147
      %p150 = scmp.ne.s32.totalorder %s135, %s149
      %p151 = scmp.eq.s32.totalorder %s31, 0
      %p152 = por %p150, %p151
      %s154 = sadd.s32 %s153, 1
      %p157 = scmp.eq.s32.totalorder %s25, 1
      %p158 = scmp.ne.s32.totalorder %s153, %s155
      %p159 = scmp.eq.s32.totalorder %s25, 0
      %p160 = por %p158, %p159
      %p161 = scmp.ne.s32.totalorder %s153, %s155
      %p162 = scmp.eq.s32.totalorder %s30, 1
      %p163 = por %p161, %p162
      %p164 = scmp.ne.s32.totalorder %s155, %s156
      %p165 = scmp.eq.s32.totalorder %s30, 0
      %p166 = por %p164, %p165
      %p167 = scmp.ne.s32.totalorder %s155, %s156
      %p168 = scmp.eq.s32.totalorder %s31, 1
      %p169 = por %p167, %p168
      %p171 = scmp.ne.s32.totalorder %s156, %s170
      %p172 = scmp.eq.s32.totalorder %s31, 0
      %p173 = por %p171, %p172
      %s175 = sadd.s32 %s174, 1
      %p178 = scmp.eq.s32.totalorder %s25, 1
      %p179 = scmp.ne.s32.totalorder %s174, %s176
      %p180 = scmp.eq.s32.totalorder %s25, 0
      %p181 = por %p179, %p180
      %p182 = scmp.ne.s32.totalorder %s174, %s176
      %p183 = scmp.eq.s32.totalorder %s30, 1
      %p184 = por %p182, %p183
      %p185 = scmp.ne.s32.totalorder %s176, %s177
      %p186 = scmp.eq.s32.totalorder %s30, 0
      %p187 = por %p185, %p186
      %p188 = scmp.ne.s32.totalorder %s176, %s177
      %p189 = scmp.eq.s32.totalorder %s31, 1
      %p190 = por %p188, %p189
      %p192 = scmp.ne.s32.totalorder %s177, %s191
      %p193 = scmp.eq.s32.totalorder %s31, 0
      %p194 = por %p192, %p193
      %s196 = sadd.s32 %s195, 1
      %p199 = scmp.eq.s32.totalorder %s25, 1
      %p200 = scmp.ne.s32.totalorder %s195, %s197
      %p201 = scmp.eq.s32.totalorder %s25, 0
      %p202 = por %p200, %p201
      %p203 = scmp.ne.s32.totalorder %s195, %s197
      %p204 = scmp.eq.s32.totalorder %s30, 1
      %p205 = por %p203, %p204
      %p206 = scmp.ne.s32.totalorder %s197, %s198
      %p207 = scmp.eq.s32.totalorder %s30, 0
      %p208 = por %p206, %p207
      %p209 = scmp.ne.s32.totalorder %s197, %s198
      %p210 = scmp.eq.s32.totalorder %s31, 1
      %p211 = por %p209, %p210
      %p213 = scmp.ne.s32.totalorder %s198, %s212
      %p214 = scmp.eq.s32.totalorder %s31, 0
      %p215 = por %p213, %p214
      %s216 = ssub.s32 %s25, %s32
      %p217 = scmp.eq.s32.totalorder %s216, 0
      %s219 = sadd.s32 %s218, 1
      %s220 = scalar_select %p217, %s218, %s219
      %p223 = pneg %p217
      %p224 = scmp.eq.s32.totalorder %s25, 1
      %p225 = por %p223, %p224
      %p226 = scmp.ne.s32.totalorder %s218, %s221
      %p227 = scmp.eq.s32.totalorder %s25, 0
      %p228 = por %p226, %p227
      %p229 = scmp.ne.s32.totalorder %s218, %s221
      %p230 = scmp.eq.s32.totalorder %s30, 1
      %p231 = por %p229, %p230
      %p232 = scmp.ne.s32.totalorder %s221, %s222
      %p233 = scmp.eq.s32.totalorder %s30, 0
      %p234 = por %p232, %p233
      %p235 = scmp.ne.s32.totalorder %s221, %s222
      %p236 = scmp.eq.s32.totalorder %s31, 1
      %p237 = por %p235, %p236
      %p239 = scmp.ne.s32.totalorder %s222, %s238
      %p240 = scmp.eq.s32.totalorder %s31, 0
      %p241 = por %p239, %p240
      %p242 = scmp.le.s32.totalorder 1, %s25
      %p243 = scmp.lt.s32.totalorder %s25, 3
      %p244 = pnand %p242, %p243
      %p245 = pneg %p244
      // Predicated region
      $region9: #{tpu_custom_call.1} parent=5 // pred_check
        _
      $region10: #{tpu_custom_call.1} parent=5 // pred_check_branch
        %247 = sbr.rel (%p244) target = $region12
      $region11: #{tpu_custom_call.1} parent=5 // pred_region
        %s248 = ssub.s32 %s25, 1
        // Predicated region
        $region13: #{tpu_custom_call.1} parent=11 // pred_check
          %p249 = pneg %p124
        $region14: #{tpu_custom_call.1} parent=11 // pred_check_branch
          %251 = sbr.rel (%p249) target = $region16
        $region15: #{tpu_custom_call.1} parent=11 // pred_region
          %s253 = ssub.s32 256, 256
          %254 = vsyncadd [#allocation9], %s253
          %s255 = sshll.u32 [#allocation8], 4
          %s256 = int_to_ptr.vmem [resolvable:$true] %s255
          %261 = dma.hbm_to_vmem [thread:$0]  %s3, 256, %s256, [#allocation9], 64, 64, 4
        $region16: #{tpu_custom_call.1} parent=11 // pred_fallthru
          _
        // Predicated region
        $region17: #{tpu_custom_call.1} parent=11 // pred_check
          %p262 = pneg %p145
        $region18: #{tpu_custom_call.1} parent=11 // pred_check_branch
          %264 = sbr.rel (%p262) target = $region20
        $region19: #{tpu_custom_call.1} parent=11 // pred_region
          %s266 = ssub.s32 256, 256
          %267 = vsyncadd [#allocation9], %s266
          %s268 = sshll.u32 [#allocation10], 4
          %s269 = int_to_ptr.vmem [resolvable:$true] %s268
          %274 = dma.hbm_to_vmem [thread:$0]  %s4, 256, %s269, [#allocation9], 64, 64, 4
        $region20: #{tpu_custom_call.1} parent=11 // pred_fallthru
          _
        // Predicated region
        $region21: #{tpu_custom_call.1} parent=11 // pred_check
          %p275 = pneg %p166
        $region22: #{tpu_custom_call.1} parent=11 // pred_check_branch
          %277 = sbr.rel (%p275) target = $region24
        $region23: #{tpu_custom_call.1} parent=11 // pred_region
          _
        $region24: #{tpu_custom_call.1} parent=11 // pred_fallthru
          _
        // Predicated region
        $region25: #{tpu_custom_call.1} parent=11 // pred_check
          %p278 = pneg %p187
        $region26: #{tpu_custom_call.1} parent=11 // pred_check_branch
          %280 = sbr.rel (%p278) target = $region28
        $region27: #{tpu_custom_call.1} parent=11 // pred_region
          %s282 = ssub.s32 256, 256
          %283 = vsyncadd [#allocation12], %s282
          %s284 = sshll.u32 [#allocation11], 4
          %s285 = int_to_ptr.vmem [resolvable:$true] %s284
          %290 = dma.hbm_to_vmem [thread:$0]  %s6, 256, %s285, [#allocation12], 64, 64, 4
        $region28: #{tpu_custom_call.1} parent=11 // pred_fallthru
          _
        // Predicated region
        $region29: #{tpu_custom_call.1} parent=11 // pred_check
          %p291 = pneg %p208
        $region30: #{tpu_custom_call.1} parent=11 // pred_check_branch
          %293 = sbr.rel (%p291) target = $region32
        $region31: #{tpu_custom_call.1} parent=11 // pred_region
          _
        $region32: #{tpu_custom_call.1} parent=11 // pred_fallthru
          _
      $region12: #{tpu_custom_call.1} parent=5 // pred_fallthru
        _
      %p294 = scmp.lt.s32.totalorder %s25, 2
      // Predicated region
      $region33: #{tpu_custom_call.1} parent=5 // pred_check
        %p295 = pneg %p294
      $region34: #{tpu_custom_call.1} parent=5 // pred_check_branch
        %297 = sbr.rel (%p295) target = $region36
      $region35: #{tpu_custom_call.1} parent=5 // pred_region
        // Predicated region
        $region37: #{tpu_custom_call.1} parent=35 // pred_check
          %p298 = pneg %p45
        $region38: #{tpu_custom_call.1} parent=35 // pred_check_branch
          %300 = sbr.rel (%p298) target = $region40
        $region39: #{tpu_custom_call.1} parent=35 // pred_region
          %s301 = sand.u32 %s35, 1
          %s302 = scalar_lea.sflag [#allocation3], %s301
          %s303 = sand.u32 %s35, 1
          %s304 = smul.addr %s303, 4
          %s305 = scalar_lea.vmem [#allocation2], %s304
          %s307 = ssub.s32 64, 64
          %308 = vsyncadd %s302, %s307
          %s309 = smul.addr %s25, 64
          %s310 = scalar_lea.hbm %s0, %s309
          %s312 = sshll.u32 %s305, 4
          %s313 = int_to_ptr.vmem [resolvable:$true] %s312
          %315 = dma.hbm_to_vmem [thread:$0]  %s310, 64, %s313, %s302
        $region40: #{tpu_custom_call.1} parent=35 // pred_fallthru
          _
        // Predicated region
        $region41: #{tpu_custom_call.1} parent=35 // pred_check
          %p316 = pneg %p71
        $region42: #{tpu_custom_call.1} parent=35 // pred_check_branch
          %318 = sbr.rel (%p316) target = $region44
        $region43: #{tpu_custom_call.1} parent=35 // pred_region
          %s319 = sand.u32 %s25, 1
          %s320 = scalar_lea.sflag [#allocation6], %s319
          %s321 = sand.u32 %s61, 1
          %s322 = smul.addr %s321, 4
          %s323 = scalar_lea.vmem [#allocation5], %s322
          %s325 = ssub.s32 64, 64
          %326 = vsyncadd %s320, %s325
          %s327 = smul.addr %s25, 64
          %s328 = scalar_lea.hbm %s1, %s327
          %s330 = sshll.u32 %s323, 4
          %s331 = int_to_ptr.vmem [resolvable:$true] %s330
          %333 = dma.hbm_to_vmem [thread:$0]  %s328, 64, %s331, %s320
        $region44: #{tpu_custom_call.1} parent=35 // pred_fallthru
          _
        // Predicated region
        $region45: #{tpu_custom_call.1} parent=35 // pred_check
          %p334 = pneg %p97
        $region46: #{tpu_custom_call.1} parent=35 // pred_check_branch
          %336 = sbr.rel (%p334) target = $region48
        $region47: #{tpu_custom_call.1} parent=35 // pred_region
          %s337 = sand.u32 %s25, 1
          %s338 = scalar_lea.sflag [#allocation6], %s337
          %s339 = sand.u32 %s87, 1
          %s340 = smul.addr %s339, 4
          %s341 = scalar_lea.vmem [#allocation7], %s340
          %s343 = ssub.s32 64, 64
          %344 = vsyncadd %s338, %s343
          %s345 = smul.addr %s25, 64
          %s346 = scalar_lea.hbm %s2, %s345
          %s348 = sshll.u32 %s341, 4
          %s349 = int_to_ptr.vmem [resolvable:$true] %s348
          %351 = dma.hbm_to_vmem [thread:$0]  %s346, 64, %s349, %s338
        $region48: #{tpu_custom_call.1} parent=35 // pred_fallthru
          _
      $region36: #{tpu_custom_call.1} parent=5 // pred_fallthru
        _
      %p352 = scmp.le.s32.totalorder 1, %s25
      %p353 = scmp.lt.s32.totalorder %s25, 3
      %p354 = pnand %p352, %p353
      %p355 = pneg %p354
      // Predicated region
      $region49: #{tpu_custom_call.1} parent=5 // pred_check
        _
      $region50: #{tpu_custom_call.1} parent=5 // pred_check_branch
        %357 = sbr.rel (%p354) target = $region52
      $region51: #{tpu_custom_call.1} parent=5 // pred_region
        %s358 = ssub.s32 %s25, 1
        %s359 = sand.u32 %s38, 1
        %s360 = scalar_lea.sflag [#allocation3], %s359
        %s361 = sand.u32 %s38, 1
        %s362 = smul.addr %s361, 4
        %s363 = scalar_lea.vmem [#allocation2], %s362
        // Predicated region
        $region53: #{tpu_custom_call.1} parent=51 // pred_check
          %p364 = pneg %p51
        $region54: #{tpu_custom_call.1} parent=51 // pred_check_branch
          %366 = sbr.rel (%p364) target = $region56
        $region55: #{tpu_custom_call.1} parent=51 // pred_region
          %367 = dma.done %s360, 64
        $region56: #{tpu_custom_call.1} parent=51 // pred_fallthru
          _
        %s368 = sand.u32 %s30, 1
        %s369 = scalar_lea.sflag [#allocation6], %s368
        %s370 = sand.u32 %s64, 1
        %s371 = smul.addr %s370, 4
        %s372 = scalar_lea.vmem [#allocation5], %s371
        // Predicated region
        $region57: #{tpu_custom_call.1} parent=51 // pred_check
          %p373 = pneg %p77
        $region58: #{tpu_custom_call.1} parent=51 // pred_check_branch
          %375 = sbr.rel (%p373) target = $region60
        $region59: #{tpu_custom_call.1} parent=51 // pred_region
          %376 = dma.done %s369, 64
        $region60: #{tpu_custom_call.1} parent=51 // pred_fallthru
          _
        %s377 = sand.u32 %s30, 1
        %s378 = scalar_lea.sflag [#allocation6], %s377
        %s379 = sand.u32 %s90, 1
        %s380 = smul.addr %s379, 4
        %s381 = scalar_lea.vmem [#allocation7], %s380
        // Predicated region
        $region61: #{tpu_custom_call.1} parent=51 // pred_check
          %p382 = pneg %p103
        $region62: #{tpu_custom_call.1} parent=51 // pred_check_branch
          %384 = sbr.rel (%p382) target = $region64
        $region63: #{tpu_custom_call.1} parent=51 // pred_region
          %385 = dma.done %s378, 64
        $region64: #{tpu_custom_call.1} parent=51 // pred_fallthru
          _
        // Predicated region
        $region65: #{tpu_custom_call.1} parent=51 // pred_check
          %p386 = pneg %p124
        $region66: #{tpu_custom_call.1} parent=51 // pred_check_branch
          %388 = sbr.rel (%p386) target = $region68
        $region67: #{tpu_custom_call.1} parent=51 // pred_region
          %389 = dma.done [#allocation9], 256
        $region68: #{tpu_custom_call.1} parent=51 // pred_fallthru
          _
        // Predicated region
        $region69: #{tpu_custom_call.1} parent=51 // pred_check
          %p390 = pneg %p145
        $region70: #{tpu_custom_call.1} parent=51 // pred_check_branch
          %392 = sbr.rel (%p390) target = $region72
        $region71: #{tpu_custom_call.1} parent=51 // pred_region
          %393 = dma.done [#allocation9], 256
        $region72: #{tpu_custom_call.1} parent=51 // pred_fallthru
          _
        // Predicated region
        $region73: #{tpu_custom_call.1} parent=51 // pred_check
          %p394 = pneg %p187
        $region74: #{tpu_custom_call.1} parent=51 // pred_check_branch
          %396 = sbr.rel (%p394) target = $region76
        $region75: #{tpu_custom_call.1} parent=51 // pred_region
          %397 = dma.done [#allocation12], 256
        $region76: #{tpu_custom_call.1} parent=51 // pred_fallthru
          _
        %s398 = sand.u32 %s38, 1
        %s399 = scalar_lea.sflag [#allocation3], %s398
        %s400 = sand.u32 %s38, 1
        %s401 = smul.addr %s400, 4
        %s402 = scalar_lea.vmem [#allocation2], %s401
        %p403 = pneg %p51
        %p404 = pneg %p48
        %s405 = sand.u32 %s30, 1
        %s406 = scalar_lea.sflag [#allocation6], %s405
        %s407 = sand.u32 %s64, 1
        %s408 = smul.addr %s407, 4
        %s409 = scalar_lea.vmem [#allocation5], %s408
        %p410 = pneg %p77
        %p411 = pneg %p74
        %s412 = sand.u32 %s30, 1
        %s413 = scalar_lea.sflag [#allocation6], %s412
        %s414 = sand.u32 %s90, 1
        %s415 = smul.addr %s414, 4
        %s416 = scalar_lea.vmem [#allocation7], %s415
        %p417 = pneg %p103
        %p418 = pneg %p100
        %p419 = pneg %p124
        %p420 = pneg %p121
        %p421 = pneg %p145
        %p422 = pneg %p142
        %p423 = pneg %p166
        %p424 = pneg %p163
        %p425 = pneg %p187
        %p426 = pneg %p184
        %p427 = pneg %p208
        %p428 = pneg %p205
        %p429 = pneg %p234
        %p430 = pneg %p231
        %s431 = sand.u32 %s221, 1
        %s432 = scalar_lea.sflag [#allocation4], %s431
        %s433 = sand.u32 %s221, 1
        %s434 = smul.addr %s433, 8
        %s435 = scalar_lea.vmem [#allocation13], %s434
        %v437 = vld [vmem:[%s363] sm:$0xf]
        %v438 = vld [vmem:[%s372] sm:$0xf]
        %v439 = vld [vmem:[%s381] sm:$0xf]
        %v440 = vld [vmem:[#allocation11] sm:$0xf]
        %v441 = vld [vmem:[#allocation11 + $0x4] sm:$0xf]
        %v442 = vld [vmem:[#allocation11 + $0x8] sm:$0xf]
        %v443 = vld [vmem:[#allocation11 + $0xc] sm:$0xf]
        %v444 = vld [vmem:[#allocation8] sm:$0xf]
        %v445 = vld [vmem:[#allocation8 + $0x4] sm:$0xf]
        %v446 = vld [vmem:[#allocation8 + $0x8] sm:$0xf]
        %v447 = vld [vmem:[#allocation8 + $0xc] sm:$0xf]
        %v452 = vunpack.c.l.b16 %v444
        %v453 = vunpack.c.l.b16 %v445
        %v454 = vunpack.c.l.b16 %v446
        %v455 = vunpack.c.l.b16 %v447
        %v456 = vpack.c.b16 %v453, %v452
        %v457 = vpack.c.b16 %v455, %v454
        %vm460 = vcmask 261120
        %v462 = vsel %vm460, %v437, 0
        %464 = vmatprep.subr.bf16.mxu0 0
        %465 = vmatpush1.bf16.msra.mxu0 %v456
        %466 = vmatprep.subr.bf16.mxu0 0
        %467 = vmatpush1.bf16.msra.mxu0 %v457
        %468 = vmatprep.subr.bf16.mxu0 0
        %469 = vmatpush1.bf16.msra.mxu0 0
        %470 = vmatprep.subr.bf16.mxu0 0
        %471 = vmatpush1.bf16.msra.mxu0 0
        %472 = vmatprep.subr.bf16.mxu0 0
        %473 = vmatpush1.bf16.msra.mxu0 0
        %474 = vmatprep.subr.bf16.mxu0 0
        %475 = vmatpush1.bf16.msra.mxu0 0
        %476 = vmatprep.subr.bf16.mxu0 0
        %477 = vmatpush1.bf16.msra.mxu0 0
        %478 = vmatprep.subr.bf16.mxu0 0
        %479 = vmatpush1.bf16.msra.mxu0 0
        %480 = vmatprep.subr.bf16.mxu0 0
        %481 = vmatpush1.bf16.msra.mxu0 0
        %482 = vmatprep.subr.bf16.mxu0 0
        %483 = vmatpush1.bf16.msra.mxu0 0
        %484 = vmatprep.subr.bf16.mxu0 0
        %485 = vmatpush1.bf16.msra.mxu0 0
        %486 = vmatprep.subr.bf16.mxu0 0
        %487 = vmatpush1.bf16.msra.mxu0 0
        %488 = vmatprep.subr.bf16.mxu0 0
        %489 = vmatpush1.bf16.msra.mxu0 0
        %490 = vmatprep.subr.bf16.mxu0 0
        %491 = vmatpush1.bf16.msra.mxu0 0
        %492 = vmatprep.subr.bf16.mxu0 0
        %493 = vmatpush1.bf16.msra.mxu0 0
        %494 = vmatprep.subr.bf16.mxu0 0
        %495 = vmatpush1.bf16.msra.mxu0 0
        %496 = vmatprep.mubr.bf16.mxu0 0
        %497 = vmatmul.mubr.bf16.gmra.mrb[0].mxu0 %v462
        %v498 = vpop.f32.mrb[0].mxu0
        %v499 = vadd.f32 0.0, %v498
        %v500 = vpop.f32.mrb[0].mxu0
        %v501 = vpop.f32.mrb[0].mxu0
        %v502 = vpop.f32.mrb[0].mxu0
        %503 = vdwg.mxu0
        %v504 = vpack.c.bf16 %v499, %v499
        %v505 = vld [vmem:[#allocation10] sm:$0xf]
        %v506 = vld [vmem:[#allocation10 + $0x4] sm:$0xf]
        %v507 = vld [vmem:[#allocation10 + $0x8] sm:$0xf]
        %v508 = vld [vmem:[#allocation10 + $0xc] sm:$0xf]
        %v513 = vunpack.c.l.b16 %v505
        %v514 = vunpack.c.l.b16 %v506
        %v515 = vunpack.c.l.b16 %v507
        %v516 = vunpack.c.l.b16 %v508
        %v517 = vpack.c.b16 %v514, %v513
        %v518 = vpack.c.b16 %v516, %v515
        %v522 = vsel %vm460, %v438, 0
        %524 = vmatprep.subr.bf16.mxu0 0
        %525 = vmatpush1.bf16.msra.mxu0 %v517
        %526 = vmatprep.subr.bf16.mxu0 0
        %527 = vmatpush1.bf16.msra.mxu0 %v518
        %528 = vmatprep.subr.bf16.mxu0 0
        %529 = vmatpush1.bf16.msra.mxu0 0
        %530 = vmatprep.subr.bf16.mxu0 0
        %531 = vmatpush1.bf16.msra.mxu0 0
        %532 = vmatprep.subr.bf16.mxu0 0
        %533 = vmatpush1.bf16.msra.mxu0 0
        %534 = vmatprep.subr.bf16.mxu0 0
        %535 = vmatpush1.bf16.msra.mxu0 0
        %536 = vmatprep.subr.bf16.mxu0 0
        %537 = vmatpush1.bf16.msra.mxu0 0
        %538 = vmatprep.subr.bf16.mxu0 0
        %539 = vmatpush1.bf16.msra.mxu0 0
        %540 = vmatprep.subr.bf16.mxu0 0
        %541 = vmatpush1.bf16.msra.mxu0 0
        %542 = vmatprep.subr.bf16.mxu0 0
        %543 = vmatpush1.bf16.msra.mxu0 0
        %544 = vmatprep.subr.bf16.mxu0 0
        %545 = vmatpush1.bf16.msra.mxu0 0
        %546 = vmatprep.subr.bf16.mxu0 0
        %547 = vmatpush1.bf16.msra.mxu0 0
        %548 = vmatprep.subr.bf16.mxu0 0
        %549 = vmatpush1.bf16.msra.mxu0 0
        %550 = vmatprep.subr.bf16.mxu0 0
        %551 = vmatpush1.bf16.msra.mxu0 0
        %552 = vmatprep.subr.bf16.mxu0 0
        %553 = vmatpush1.bf16.msra.mxu0 0
        %554 = vmatprep.subr.bf16.mxu0 0
        %555 = vmatpush1.bf16.msra.mxu0 0
        %556 = vmatprep.mubr.bf16.mxu0 0
        %557 = vmatmul.mubr.bf16.gmra.mrb[0].mxu0 %v522
        %v558 = vpop.f32.mrb[0].mxu0
        %v559 = vadd.f32 0.0, %v558
        %v560 = vpop.f32.mrb[0].mxu0
        %v561 = vpop.f32.mrb[0].mxu0
        %v562 = vpop.f32.mrb[0].mxu0
        %563 = vdwg.mxu0
        %v564 = vpack.c.bf16 %v559, %v559
        %v565 = vld [vmem:[%s5] sm:$0xf]
        %v566 = vld [vmem:[%s5 + $0x4] sm:$0xf]
        %v567 = vld [vmem:[%s5 + $0x8] sm:$0xf]
        %v568 = vld [vmem:[%s5 + $0xc] sm:$0xf]
        %v573 = vunpack.c.l.b16 %v565
        %v574 = vunpack.c.l.b16 %v566
        %v575 = vunpack.c.l.b16 %v567
        %v576 = vunpack.c.l.b16 %v568
        %v577 = vpack.c.b16 %v574, %v573
        %v578 = vpack.c.b16 %v576, %v575
        %v582 = vsel %vm460, %v439, 0
        %584 = vmatprep.subr.bf16.mxu0 0
        %585 = vmatpush1.bf16.msra.mxu0 %v577
        %586 = vmatprep.subr.bf16.mxu0 0
        %587 = vmatpush1.bf16.msra.mxu0 %v578
        %588 = vmatprep.subr.bf16.mxu0 0
        %589 = vmatpush1.bf16.msra.mxu0 0
        %590 = vmatprep.subr.bf16.mxu0 0
        %591 = vmatpush1.bf16.msra.mxu0 0
        %592 = vmatprep.subr.bf16.mxu0 0
        %593 = vmatpush1.bf16.msra.mxu0 0
        %594 = vmatprep.subr.bf16.mxu0 0
        %595 = vmatpush1.bf16.msra.mxu0 0
        %596 = vmatprep.subr.bf16.mxu0 0
        %597 = vmatpush1.bf16.msra.mxu0 0
        %598 = vmatprep.subr.bf16.mxu0 0
        %599 = vmatpush1.bf16.msra.mxu0 0
        %600 = vmatprep.subr.bf16.mxu0 0
        %601 = vmatpush1.bf16.msra.mxu0 0
        %602 = vmatprep.subr.bf16.mxu0 0
        %603 = vmatpush1.bf16.msra.mxu0 0
        %604 = vmatprep.subr.bf16.mxu0 0
        %605 = vmatpush1.bf16.msra.mxu0 0
        %606 = vmatprep.subr.bf16.mxu0 0
        %607 = vmatpush1.bf16.msra.mxu0 0
        %608 = vmatprep.subr.bf16.mxu0 0
        %609 = vmatpush1.bf16.msra.mxu0 0
        %610 = vmatprep.subr.bf16.mxu0 0
        %611 = vmatpush1.bf16.msra.mxu0 0
        %612 = vmatprep.subr.bf16.mxu0 0
        %613 = vmatpush1.bf16.msra.mxu0 0
        %614 = vmatprep.subr.bf16.mxu0 0
        %615 = vmatpush1.bf16.msra.mxu0 0
        %616 = vmatprep.mubr.bf16.mxu0 0
        %617 = vmatmul.mubr.bf16.gmra.mrb[0].mxu0 %v582
        %v618 = vpop.f32.mrb[0].mxu0
        %v619 = vadd.f32 0.0, %v618
        %v620 = vpop.f32.mrb[0].mxu0
        %v621 = vpop.f32.mrb[0].mxu0
        %v622 = vpop.f32.mrb[0].mxu0
        %623 = vdwg.mxu0
        %v624 = vpack.c.bf16 %v619, %v619
        %v625 = vld [vmem:[%s7] sm:$0x1]
        %v627 = vlaneseq
        %v628 = vshrl.u32 %v627, 7
        %v629 = vsub.s32 0, %v628
        %v630 = vrot.slane %v625, %v629
        %vm632 = vcmask 64512
        %v634 = vsel %vm632, %v504, 0
        %v637 = vsel %vm632, %v564, 0
        %639 = vmatprep.subr.bf16.mxu0 0
        %640 = vmatpush1.bf16.xpose.msra.mxu0 %v637
        %641 = vmatprep.subr.bf16.mxu0 0
        %642 = vmatpush1.bf16.xpose.msra.mxu0 0
        %643 = vmatprep.subr.bf16.mxu0 0
        %644 = vmatpush1.bf16.xpose.msra.mxu0 0
        %645 = vmatprep.subr.bf16.mxu0 0
        %646 = vmatpush1.bf16.xpose.msra.mxu0 0
        %647 = vmatprep.subr.bf16.mxu0 0
        %648 = vmatpush1.bf16.xpose.msra.mxu0 0
        %649 = vmatprep.subr.bf16.mxu0 0
        %650 = vmatpush1.bf16.xpose.msra.mxu0 0
        %651 = vmatprep.subr.bf16.mxu0 0
        %652 = vmatpush1.bf16.xpose.msra.mxu0 0
        %653 = vmatprep.subr.bf16.mxu0 0
        %654 = vmatpush1.bf16.xpose.msra.mxu0 0
        %655 = vmatprep.subr.bf16.mxu0 0
        %656 = vmatpush1.bf16.xpose.msra.mxu0 0
        %657 = vmatprep.subr.bf16.mxu0 0
        %658 = vmatpush1.bf16.xpose.msra.mxu0 0
        %659 = vmatprep.subr.bf16.mxu0 0
        %660 = vmatpush1.bf16.xpose.msra.mxu0 0
        %661 = vmatprep.subr.bf16.mxu0 0
        %662 = vmatpush1.bf16.xpose.msra.mxu0 0
        %663 = vmatprep.subr.bf16.mxu0 0
        %664 = vmatpush1.bf16.xpose.msra.mxu0 0
        %665 = vmatprep.subr.bf16.mxu0 0
        %666 = vmatpush1.bf16.xpose.msra.mxu0 0
        %667 = vmatprep.subr.bf16.mxu0 0
        %668 = vmatpush1.bf16.xpose.msra.mxu0 0
        %669 = vmatprep.subr.bf16.mxu0 0
        %670 = vmatpush1.bf16.xpose.msra.mxu0 0
        %671 = vmatprep.mubr.bf16.mxu0 0
        %672 = vmatmul.mubr.bf16.gmra.mrb[0].mxu0 %v634
        %v673 = vpop.f32.mrb[0].mxu0
        %v674 = vadd.f32 0.0, %v673
        %v675 = vpop.f32.mrb[0].mxu0
        %v676 = vpop.f32.mrb[0].mxu0
        %v677 = vpop.f32.mrb[0].mxu0
        %678 = vdwg.mxu0
        %v679 = vsel %vm632, %v674, -inf
        %680 = vmax.xlane.f32.xlu0 %v679
        %v681 = vpop.xlane.xlu0 %680
        %v682 = vsub.f32 %v674, %v681
        %v683 = vmul.f32 %v682, 1.442695
        %v684 = vpow.pop %v683
        %v685 = vsel %vm632, %v684, 0.0
        %686 = vadd.xlane.f32.xlu0 %v685
        %v687 = vpop.xlane.xlu0 %686
        %v688 = vrcp.pop %v687
        %v689 = vmul.f32 %v684, %v688
        %v690 = vpack.c.bf16 %v689, %v689
        %v692 = vsel %vm632, %v690, 0
        %vm694 = vcmask 1043456
        %v696 = vsel %vm694, %v624, 0
        %698 = vmatprep.subr.bf16.mxu0 0
        %699 = vmatpush1.bf16.msra.mxu0 %v696
        %700 = vmatprep.subr.bf16.mxu0 0
        %701 = vmatpush1.bf16.msra.mxu0 0
        %702 = vmatprep.subr.bf16.mxu0 0
        %703 = vmatpush1.bf16.msra.mxu0 0
        %704 = vmatprep.subr.bf16.mxu0 0
        %705 = vmatpush1.bf16.msra.mxu0 0
        %706 = vmatprep.subr.bf16.mxu0 0
        %707 = vmatpush1.bf16.msra.mxu0 0
        %708 = vmatprep.subr.bf16.mxu0 0
        %709 = vmatpush1.bf16.msra.mxu0 0
        %710 = vmatprep.subr.bf16.mxu0 0
        %711 = vmatpush1.bf16.msra.mxu0 0
        %712 = vmatprep.subr.bf16.mxu0 0
        %713 = vmatpush1.bf16.msra.mxu0 0
        %714 = vmatprep.subr.bf16.mxu0 0
        %715 = vmatpush1.bf16.msra.mxu0 0
        %716 = vmatprep.subr.bf16.mxu0 0
        %717 = vmatpush1.bf16.msra.mxu0 0
        %718 = vmatprep.subr.bf16.mxu0 0
        %719 = vmatpush1.bf16.msra.mxu0 0
        %720 = vmatprep.subr.bf16.mxu0 0
        %721 = vmatpush1.bf16.msra.mxu0 0
        %722 = vmatprep.subr.bf16.mxu0 0
        %723 = vmatpush1.bf16.msra.mxu0 0
        %724 = vmatprep.subr.bf16.mxu0 0
        %725 = vmatpush1.bf16.msra.mxu0 0
        %726 = vmatprep.subr.bf16.mxu0 0
        %727 = vmatpush1.bf16.msra.mxu0 0
        %728 = vmatprep.subr.bf16.mxu0 0
        %729 = vmatpush1.bf16.msra.mxu0 0
        %730 = vmatprep.mubr.bf16.mxu0 0
        %731 = vmatmul.mubr.bf16.gmra.mrb[0].mxu0 %v692
        %v732 = vpop.f32.mrb[0].mxu0
        %v733 = vadd.f32 0.0, %v732
        %v734 = vpop.f32.mrb[0].mxu0
        %v735 = vpop.f32.mrb[0].mxu0
        %v736 = vpop.f32.mrb[0].mxu0
        %737 = vdwg.mxu0
        %v738 = vpack.c.bf16 %v733, %v733
        %v740 = vsel %vm632, %v738, 0
        %v743 = vsel %vm694, %v440, 0
        %745 = vmatprep.subr.bf16.mxu0 0
        %746 = vmatpush1.bf16.msra.mxu0 %v743
        %747 = vmatprep.subr.bf16.mxu0 0
        %748 = vmatpush1.bf16.msra.mxu0 0
        %749 = vmatprep.subr.bf16.mxu0 0
        %750 = vmatpush1.bf16.msra.mxu0 0
        %751 = vmatprep.subr.bf16.mxu0 0
        %752 = vmatpush1.bf16.msra.mxu0 0
        %753 = vmatprep.subr.bf16.mxu0 0
        %754 = vmatpush1.bf16.msra.mxu0 0
        %755 = vmatprep.subr.bf16.mxu0 0
        %756 = vmatpush1.bf16.msra.mxu0 0
        %757 = vmatprep.subr.bf16.mxu0 0
        %758 = vmatpush1.bf16.msra.mxu0 0
        %759 = vmatprep.subr.bf16.mxu0 0
        %760 = vmatpush1.bf16.msra.mxu0 0
        %761 = vmatprep.subr.bf16.mxu0 0
        %762 = vmatpush1.bf16.msra.mxu0 0
        %763 = vmatprep.subr.bf16.mxu0 0
        %764 = vmatpush1.bf16.msra.mxu0 0
        %765 = vmatprep.subr.bf16.mxu0 0
        %766 = vmatpush1.bf16.msra.mxu0 0
        %767 = vmatprep.subr.bf16.mxu0 0
        %768 = vmatpush1.bf16.msra.mxu0 0
        %769 = vmatprep.subr.bf16.mxu0 0
        %770 = vmatpush1.bf16.msra.mxu0 0
        %771 = vmatprep.subr.bf16.mxu0 0
        %772 = vmatpush1.bf16.msra.mxu0 0
        %773 = vmatprep.subr.bf16.mxu0 0
        %774 = vmatpush1.bf16.msra.mxu0 0
        %775 = vmatprep.subr.bf16.mxu0 0
        %776 = vmatpush1.bf16.msra.mxu0 0
        %777 = vmatprep.mubr.bf16.mxu0 0
        %778 = vmatmul.mubr.bf16.gmra.mrb[0].mxu0 %v740
        %v779 = vpop.f32.mrb[0].mxu0
        %v780 = vadd.f32 0.0, %v779
        %v781 = vpop.f32.mrb[0].mxu0
        %v782 = vpop.f32.mrb[0].mxu0
        %v783 = vpop.f32.mrb[0].mxu0
        %784 = vdwg.mxu0
        %v785 = vadd.f32 %v630, %v780
        %787 = vrot.lane.b32.xlu0 %v504, 120
        %v788 = vpop.permute.xlu0 %787
        %790 = vrot.lane.b32.xlu0 %v564, 120
        %v791 = vpop.permute.xlu0 %790
        %v793 = vsel %vm632, %v788, 0
        %v796 = vsel %vm632, %v791, 0
        %798 = vmatprep.subr.bf16.mxu0 0
        %799 = vmatpush1.bf16.xpose.msra.mxu0 %v796
        %800 = vmatprep.subr.bf16.mxu0 0
        %801 = vmatpush1.bf16.xpose.msra.mxu0 0
        %802 = vmatprep.subr.bf16.mxu0 0
        %803 = vmatpush1.bf16.xpose.msra.mxu0 0
        %804 = vmatprep.subr.bf16.mxu0 0
        %805 = vmatpush1.bf16.xpose.msra.mxu0 0
        %806 = vmatprep.subr.bf16.mxu0 0
        %807 = vmatpush1.bf16.xpose.msra.mxu0 0
        %808 = vmatprep.subr.bf16.mxu0 0
        %809 = vmatpush1.bf16.xpose.msra.mxu0 0
        %810 = vmatprep.subr.bf16.mxu0 0
        %811 = vmatpush1.bf16.xpose.msra.mxu0 0
        %812 = vmatprep.subr.bf16.mxu0 0
        %813 = vmatpush1.bf16.xpose.msra.mxu0 0
        %814 = vmatprep.subr.bf16.mxu0 0
        %815 = vmatpush1.bf16.xpose.msra.mxu0 0
        %816 = vmatprep.subr.bf16.mxu0 0
        %817 = vmatpush1.bf16.xpose.msra.mxu0 0
        %818 = vmatprep.subr.bf16.mxu0 0
        %819 = vmatpush1.bf16.xpose.msra.mxu0 0
        %820 = vmatprep.subr.bf16.mxu0 0
        %821 = vmatpush1.bf16.xpose.msra.mxu0 0
        %822 = vmatprep.subr.bf16.mxu0 0
        %823 = vmatpush1.bf16.xpose.msra.mxu0 0
        %824 = vmatprep.subr.bf16.mxu0 0
        %825 = vmatpush1.bf16.xpose.msra.mxu0 0
        %826 = vmatprep.subr.bf16.mxu0 0
        %827 = vmatpush1.bf16.xpose.msra.mxu0 0
        %828 = vmatprep.subr.bf16.mxu0 0
        %829 = vmatpush1.bf16.xpose.msra.mxu0 0
        %830 = vmatprep.mubr.bf16.mxu0 0
        %831 = vmatmul.mubr.bf16.gmra.mrb[0].mxu0 %v793
        %v832 = vpop.f32.mrb[0].mxu0
        %v833 = vadd.f32 0.0, %v832
        %v834 = vpop.f32.mrb[0].mxu0
        %v835 = vpop.f32.mrb[0].mxu0
        %v836 = vpop.f32.mrb[0].mxu0
        %837 = vdwg.mxu0
        %v838 = vsel %vm632, %v833, -inf
        %839 = vmax.xlane.f32.xlu0 %v838
        %v840 = vpop.xlane.xlu0 %839
        %v841 = vsub.f32 %v833, %v840
        %v842 = vmul.f32 %v841, 1.442695
        %v843 = vpow.pop %v842
        %v844 = vsel %vm632, %v843, 0.0
        %845 = vadd.xlane.f32.xlu0 %v844
        %v846 = vpop.xlane.xlu0 %845
        %v847 = vrcp.pop %v846
        %v848 = vmul.f32 %v843, %v847
        %v849 = vpack.c.bf16 %v848, %v848
        %851 = vrot.lane.b32.xlu0 %v624, 120
        %v852 = vpop.permute.xlu0 %851
        %v854 = vsel %vm632, %v849, 0
        %v857 = vsel %vm694, %v852, 0
        %859 = vmatprep.subr.bf16.mxu0 0
        %860 = vmatpush1.bf16.msra.mxu0 %v857
        %861 = vmatprep.subr.bf16.mxu0 0
        %862 = vmatpush1.bf16.msra.mxu0 0
        %863 = vmatprep.subr.bf16.mxu0 0
        %864 = vmatpush1.bf16.msra.mxu0 0
        %865 = vmatprep.subr.bf16.mxu0 0
        %866 = vmatpush1.bf16.msra.mxu0 0
        %867 = vmatprep.subr.bf16.mxu0 0
        %868 = vmatpush1.bf16.msra.mxu0 0
        %869 = vmatprep.subr.bf16.mxu0 0
        %870 = vmatpush1.bf16.msra.mxu0 0
        %871 = vmatprep.subr.bf16.mxu0 0
        %872 = vmatpush1.bf16.msra.mxu0 0
        %873 = vmatprep.subr.bf16.mxu0 0
        %874 = vmatpush1.bf16.msra.mxu0 0
        %875 = vmatprep.subr.bf16.mxu0 0
        %876 = vmatpush1.bf16.msra.mxu0 0
        %877 = vmatprep.subr.bf16.mxu0 0
        %878 = vmatpush1.bf16.msra.mxu0 0
        %879 = vmatprep.subr.bf16.mxu0 0
        %880 = vmatpush1.bf16.msra.mxu0 0
        %881 = vmatprep.subr.bf16.mxu0 0
        %882 = vmatpush1.bf16.msra.mxu0 0
        %883 = vmatprep.subr.bf16.mxu0 0
        %884 = vmatpush1.bf16.msra.mxu0 0
        %885 = vmatprep.subr.bf16.mxu0 0
        %886 = vmatpush1.bf16.msra.mxu0 0
        %887 = vmatprep.subr.bf16.mxu0 0
        %888 = vmatpush1.bf16.msra.mxu0 0
        %889 = vmatprep.subr.bf16.mxu0 0
        %890 = vmatpush1.bf16.msra.mxu0 0
        %891 = vmatprep.mubr.bf16.mxu0 0
        %892 = vmatmul.mubr.bf16.gmra.mrb[0].mxu0 %v854
        %v893 = vpop.f32.mrb[0].mxu0
        %v894 = vadd.f32 0.0, %v893
        %v895 = vpop.f32.mrb[0].mxu0
        %v896 = vpop.f32.mrb[0].mxu0
        %v897 = vpop.f32.mrb[0].mxu0
        %898 = vdwg.mxu0
        %v899 = vpack.c.bf16 %v894, %v894
        %v901 = vsel %vm632, %v899, 0
        %v904 = vsel %vm694, %v441, 0
        %906 = vmatprep.subr.bf16.mxu0 0
        %907 = vmatpush1.bf16.msra.mxu0 %v904
        %908 = vmatprep.subr.bf16.mxu0 0
        %909 = vmatpush1.bf16.msra.mxu0 0
        %910 = vmatprep.subr.bf16.mxu0 0
        %911 = vmatpush1.bf16.msra.mxu0 0
        %912 = vmatprep.subr.bf16.mxu0 0
        %913 = vmatpush1.bf16.msra.mxu0 0
        %914 = vmatprep.subr.bf16.mxu0 0
        %915 = vmatpush1.bf16.msra.mxu0 0
        %916 = vmatprep.subr.bf16.mxu0 0
        %917 = vmatpush1.bf16.msra.mxu0 0
        %918 = vmatprep.subr.bf16.mxu0 0
        %919 = vmatpush1.bf16.msra.mxu0 0
        %920 = vmatprep.subr.bf16.mxu0 0
        %921 = vmatpush1.bf16.msra.mxu0 0
        %922 = vmatprep.subr.bf16.mxu0 0
        %923 = vmatpush1.bf16.msra.mxu0 0
        %924 = vmatprep.subr.bf16.mxu0 0
        %925 = vmatpush1.bf16.msra.mxu0 0
        %926 = vmatprep.subr.bf16.mxu0 0
        %927 = vmatpush1.bf16.msra.mxu0 0
        %928 = vmatprep.subr.bf16.mxu0 0
        %929 = vmatpush1.bf16.msra.mxu0 0
        %930 = vmatprep.subr.bf16.mxu0 0
        %931 = vmatpush1.bf16.msra.mxu0 0
        %932 = vmatprep.subr.bf16.mxu0 0
        %933 = vmatpush1.bf16.msra.mxu0 0
        %934 = vmatprep.subr.bf16.mxu0 0
        %935 = vmatpush1.bf16.msra.mxu0 0
        %936 = vmatprep.subr.bf16.mxu0 0
        %937 = vmatpush1.bf16.msra.mxu0 0
        %938 = vmatprep.mubr.bf16.mxu0 0
        %939 = vmatmul.mubr.bf16.gmra.mrb[0].mxu0 %v901
        %v940 = vpop.f32.mrb[0].mxu0
        %v941 = vadd.f32 0.0, %v940
        %v942 = vpop.f32.mrb[0].mxu0
        %v943 = vpop.f32.mrb[0].mxu0
        %v944 = vpop.f32.mrb[0].mxu0
        %945 = vdwg.mxu0
        %v946 = vadd.f32 %v785, %v941
        %947 = vrot.lane.b32.xlu0 %v504, 112
        %v948 = vpop.permute.xlu0 %947
        %949 = vrot.lane.b32.xlu0 %v564, 112
        %v950 = vpop.permute.xlu0 %949
        %v952 = vsel %vm632, %v948, 0
        %v955 = vsel %vm632, %v950, 0
        %957 = vmatprep.subr.bf16.mxu0 0
        %958 = vmatpush1.bf16.xpose.msra.mxu0 %v955
        %959 = vmatprep.subr.bf16.mxu0 0
        %960 = vmatpush1.bf16.xpose.msra.mxu0 0
        %961 = vmatprep.subr.bf16.mxu0 0
        %962 = vmatpush1.bf16.xpose.msra.mxu0 0
        %963 = vmatprep.subr.bf16.mxu0 0
        %964 = vmatpush1.bf16.xpose.msra.mxu0 0
        %965 = vmatprep.subr.bf16.mxu0 0
        %966 = vmatpush1.bf16.xpose.msra.mxu0 0
        %967 = vmatprep.subr.bf16.mxu0 0
        %968 = vmatpush1.bf16.xpose.msra.mxu0 0
        %969 = vmatprep.subr.bf16.mxu0 0
        %970 = vmatpush1.bf16.xpose.msra.mxu0 0
        %971 = vmatprep.subr.bf16.mxu0 0
        %972 = vmatpush1.bf16.xpose.msra.mxu0 0
        %973 = vmatprep.subr.bf16.mxu0 0
        %974 = vmatpush1.bf16.xpose.msra.mxu0 0
        %975 = vmatprep.subr.bf16.mxu0 0
        %976 = vmatpush1.bf16.xpose.msra.mxu0 0
        %977 = vmatprep.subr.bf16.mxu0 0
        %978 = vmatpush1.bf16.xpose.msra.mxu0 0
        %979 = vmatprep.subr.bf16.mxu0 0
        %980 = vmatpush1.bf16.xpose.msra.mxu0 0
        %981 = vmatprep.subr.bf16.mxu0 0
        %982 = vmatpush1.bf16.xpose.msra.mxu0 0
        %983 = vmatprep.subr.bf16.mxu0 0
        %984 = vmatpush1.bf16.xpose.msra.mxu0 0
        %985 = vmatprep.subr.bf16.mxu0 0
        %986 = vmatpush1.bf16.xpose.msra.mxu0 0
        %987 = vmatprep.subr.bf16.mxu0 0
        %988 = vmatpush1.bf16.xpose.msra.mxu0 0
        %989 = vmatprep.mubr.bf16.mxu0 0
        %990 = vmatmul.mubr.bf16.gmra.mrb[0].mxu0 %v952
        %v991 = vpop.f32.mrb[0].mxu0
        %v992 = vadd.f32 0.0, %v991
        %v993 = vpop.f32.mrb[0].mxu0
        %v994 = vpop.f32.mrb[0].mxu0
        %v995 = vpop.f32.mrb[0].mxu0
        %996 = vdwg.mxu0
        %v997 = vsel %vm632, %v992, -inf
        %998 = vmax.xlane.f32.xlu0 %v997
        %v999 = vpop.xlane.xlu0 %998
        %v1000 = vsub.f32 %v992, %v999
        %v1001 = vmul.f32 %v1000, 1.442695
        %v1002 = vpow.pop %v1001
        %v1003 = vsel %vm632, %v1002, 0.0
        %1004 = vadd.xlane.f32.xlu0 %v1003
        %v1005 = vpop.xlane.xlu0 %1004
        %v1006 = vrcp.pop %v1005
        %v1007 = vmul.f32 %v1002, %v1006
        %v1008 = vpack.c.bf16 %v1007, %v1007
        %1009 = vrot.lane.b32.xlu0 %v624, 112
        %v1010 = vpop.permute.xlu0 %1009
        %v1012 = vsel %vm632, %v1008, 0
        %v1015 = vsel %vm694, %v1010, 0
        %1017 = vmatprep.subr.bf16.mxu0 0
        %1018 = vmatpush1.bf16.msra.mxu0 %v1015
        %1019 = vmatprep.subr.bf16.mxu0 0
        %1020 = vmatpush1.bf16.msra.mxu0 0
        %1021 = vmatprep.subr.bf16.mxu0 0
        %1022 = vmatpush1.bf16.msra.mxu0 0
        %1023 = vmatprep.subr.bf16.mxu0 0
        %1024 = vmatpush1.bf16.msra.mxu0 0
        %1025 = vmatprep.subr.bf16.mxu0 0
        %1026 = vmatpush1.bf16.msra.mxu0 0
        %1027 = vmatprep.subr.bf16.mxu0 0
        %1028 = vmatpush1.bf16.msra.mxu0 0
        %1029 = vmatprep.subr.bf16.mxu0 0
        %1030 = vmatpush1.bf16.msra.mxu0 0
        %1031 = vmatprep.subr.bf16.mxu0 0
        %1032 = vmatpush1.bf16.msra.mxu0 0
        %1033 = vmatprep.subr.bf16.mxu0 0
        %1034 = vmatpush1.bf16.msra.mxu0 0
        %1035 = vmatprep.subr.bf16.mxu0 0
        %1036 = vmatpush1.bf16.msra.mxu0 0
        %1037 = vmatprep.subr.bf16.mxu0 0
        %1038 = vmatpush1.bf16.msra.mxu0 0
        %1039 = vmatprep.subr.bf16.mxu0 0
        %1040 = vmatpush1.bf16.msra.mxu0 0
        %1041 = vmatprep.subr.bf16.mxu0 0
        %1042 = vmatpush1.bf16.msra.mxu0 0
        %1043 = vmatprep.subr.bf16.mxu0 0
        %1044 = vmatpush1.bf16.msra.mxu0 0
        %1045 = vmatprep.subr.bf16.mxu0 0
        %1046 = vmatpush1.bf16.msra.mxu0 0
        %1047 = vmatprep.subr.bf16.mxu0 0
        %1048 = vmatpush1.bf16.msra.mxu0 0
        %1049 = vmatprep.mubr.bf16.mxu0 0
        %1050 = vmatmul.mubr.bf16.gmra.mrb[0].mxu0 %v1012
        %v1051 = vpop.f32.mrb[0].mxu0
        %v1052 = vadd.f32 0.0, %v1051
        %v1053 = vpop.f32.mrb[0].mxu0
        %v1054 = vpop.f32.mrb[0].mxu0
        %v1055 = vpop.f32.mrb[0].mxu0
        %1056 = vdwg.mxu0
        %v1057 = vpack.c.bf16 %v1052, %v1052
        %v1059 = vsel %vm632, %v1057, 0
        %v1062 = vsel %vm694, %v442, 0
        %1064 = vmatprep.subr.bf16.mxu0 0
        %1065 = vmatpush1.bf16.msra.mxu0 %v1062
        %1066 = vmatprep.subr.bf16.mxu0 0
        %1067 = vmatpush1.bf16.msra.mxu0 0
        %1068 = vmatprep.subr.bf16.mxu0 0
        %1069 = vmatpush1.bf16.msra.mxu0 0
        %1070 = vmatprep.subr.bf16.mxu0 0
        %1071 = vmatpush1.bf16.msra.mxu0 0
        %1072 = vmatprep.subr.bf16.mxu0 0
        %1073 = vmatpush1.bf16.msra.mxu0 0
        %1074 = vmatprep.subr.bf16.mxu0 0
        %1075 = vmatpush1.bf16.msra.mxu0 0
        %1076 = vmatprep.subr.bf16.mxu0 0
        %1077 = vmatpush1.bf16.msra.mxu0 0
        %1078 = vmatprep.subr.bf16.mxu0 0
        %1079 = vmatpush1.bf16.msra.mxu0 0
        %1080 = vmatprep.subr.bf16.mxu0 0
        %1081 = vmatpush1.bf16.msra.mxu0 0
        %1082 = vmatprep.subr.bf16.mxu0 0
        %1083 = vmatpush1.bf16.msra.mxu0 0
        %1084 = vmatprep.subr.bf16.mxu0 0
        %1085 = vmatpush1.bf16.msra.mxu0 0
        %1086 = vmatprep.subr.bf16.mxu0 0
        %1087 = vmatpush1.bf16.msra.mxu0 0
        %1088 = vmatprep.subr.bf16.mxu0 0
        %1089 = vmatpush1.bf16.msra.mxu0 0
        %1090 = vmatprep.subr.bf16.mxu0 0
        %1091 = vmatpush1.bf16.msra.mxu0 0
        %1092 = vmatprep.subr.bf16.mxu0 0
        %1093 = vmatpush1.bf16.msra.mxu0 0
        %1094 = vmatprep.subr.bf16.mxu0 0
        %1095 = vmatpush1.bf16.msra.mxu0 0
        %1096 = vmatprep.mubr.bf16.mxu0 0
        %1097 = vmatmul.mubr.bf16.gmra.mrb[0].mxu0 %v1059
        %v1098 = vpop.f32.mrb[0].mxu0
        %v1099 = vadd.f32 0.0, %v1098
        %v1100 = vpop.f32.mrb[0].mxu0
        %v1101 = vpop.f32.mrb[0].mxu0
        %v1102 = vpop.f32.mrb[0].mxu0
        %1103 = vdwg.mxu0
        %v1104 = vadd.f32 %v946, %v1099
        %1105 = vrot.lane.b32.xlu0 %v504, 104
        %v1106 = vpop.permute.xlu0 %1105
        %1107 = vrot.lane.b32.xlu0 %v564, 104
        %v1108 = vpop.permute.xlu0 %1107
        %v1110 = vsel %vm632, %v1106, 0
        %v1113 = vsel %vm632, %v1108, 0
        %1115 = vmatprep.subr.bf16.mxu0 0
        %1116 = vmatpush1.bf16.xpose.msra.mxu0 %v1113
        %1117 = vmatprep.subr.bf16.mxu0 0
        %1118 = vmatpush1.bf16.xpose.msra.mxu0 0
        %1119 = vmatprep.subr.bf16.mxu0 0
        %1120 = vmatpush1.bf16.xpose.msra.mxu0 0
        %1121 = vmatprep.subr.bf16.mxu0 0
        %1122 = vmatpush1.bf16.xpose.msra.mxu0 0
        %1123 = vmatprep.subr.bf16.mxu0 0
        %1124 = vmatpush1.bf16.xpose.msra.mxu0 0
        %1125 = vmatprep.subr.bf16.mxu0 0
        %1126 = vmatpush1.bf16.xpose.msra.mxu0 0
        %1127 = vmatprep.subr.bf16.mxu0 0
        %1128 = vmatpush1.bf16.xpose.msra.mxu0 0
        %1129 = vmatprep.subr.bf16.mxu0 0
        %1130 = vmatpush1.bf16.xpose.msra.mxu0 0
        %1131 = vmatprep.subr.bf16.mxu0 0
        %1132 = vmatpush1.bf16.xpose.msra.mxu0 0
        %1133 = vmatprep.subr.bf16.mxu0 0
        %1134 = vmatpush1.bf16.xpose.msra.mxu0 0
        %1135 = vmatprep.subr.bf16.mxu0 0
        %1136 = vmatpush1.bf16.xpose.msra.mxu0 0
        %1137 = vmatprep.subr.bf16.mxu0 0
        %1138 = vmatpush1.bf16.xpose.msra.mxu0 0
        %1139 = vmatprep.subr.bf16.mxu0 0
        %1140 = vmatpush1.bf16.xpose.msra.mxu0 0
        %1141 = vmatprep.subr.bf16.mxu0 0
        %1142 = vmatpush1.bf16.xpose.msra.mxu0 0
        %1143 = vmatprep.subr.bf16.mxu0 0
        %1144 = vmatpush1.bf16.xpose.msra.mxu0 0
        %1145 = vmatprep.subr.bf16.mxu0 0
        %1146 = vmatpush1.bf16.xpose.msra.mxu0 0
        %1147 = vmatprep.mubr.bf16.mxu0 0
        %1148 = vmatmul.mubr.bf16.gmra.mrb[0].mxu0 %v1110
        %v1149 = vpop.f32.mrb[0].mxu0
        %v1150 = vadd.f32 0.0, %v1149
        %v1151 = vpop.f32.mrb[0].mxu0
        %v1152 = vpop.f32.mrb[0].mxu0
        %v1153 = vpop.f32.mrb[0].mxu0
        %1154 = vdwg.mxu0
        %v1155 = vsel %vm632, %v1150, -inf
        %1156 = vmax.xlane.f32.xlu0 %v1155
        %v1157 = vpop.xlane.xlu0 %1156
        %v1158 = vsub.f32 %v1150, %v1157
        %v1159 = vmul.f32 %v1158, 1.442695
        %v1160 = vpow.pop %v1159
        %v1161 = vsel %vm632, %v1160, 0.0
        %1162 = vadd.xlane.f32.xlu0 %v1161
        %v1163 = vpop.xlane.xlu0 %1162
        %v1164 = vrcp.pop %v1163
        %v1165 = vmul.f32 %v1160, %v1164
        %v1166 = vpack.c.bf16 %v1165, %v1165
        %1167 = vrot.lane.b32.xlu0 %v624, 104
        %v1168 = vpop.permute.xlu0 %1167
        %v1170 = vsel %vm632, %v1166, 0
        %v1173 = vsel %vm694, %v1168, 0
        %1175 = vmatprep.subr.bf16.mxu0 0
        %1176 = vmatpush1.bf16.msra.mxu0 %v1173
        %1177 = vmatprep.subr.bf16.mxu0 0
        %1178 = vmatpush1.bf16.msra.mxu0 0
        %1179 = vmatprep.subr.bf16.mxu0 0
        %1180 = vmatpush1.bf16.msra.mxu0 0
        %1181 = vmatprep.subr.bf16.mxu0 0
        %1182 = vmatpush1.bf16.msra.mxu0 0
        %1183 = vmatprep.subr.bf16.mxu0 0
        %1184 = vmatpush1.bf16.msra.mxu0 0
        %1185 = vmatprep.subr.bf16.mxu0 0
        %1186 = vmatpush1.bf16.msra.mxu0 0
        %1187 = vmatprep.subr.bf16.mxu0 0
        %1188 = vmatpush1.bf16.msra.mxu0 0
        %1189 = vmatprep.subr.bf16.mxu0 0
        %1190 = vmatpush1.bf16.msra.mxu0 0
        %1191 = vmatprep.subr.bf16.mxu0 0
        %1192 = vmatpush1.bf16.msra.mxu0 0
        %1193 = vmatprep.subr.bf16.mxu0 0
        %1194 = vmatpush1.bf16.msra.mxu0 0
        %1195 = vmatprep.subr.bf16.mxu0 0
        %1196 = vmatpush1.bf16.msra.mxu0 0
        %1197 = vmatprep.subr.bf16.mxu0 0
        %1198 = vmatpush1.bf16.msra.mxu0 0
        %1199 = vmatprep.subr.bf16.mxu0 0
        %1200 = vmatpush1.bf16.msra.mxu0 0
        %1201 = vmatprep.subr.bf16.mxu0 0
        %1202 = vmatpush1.bf16.msra.mxu0 0
        %1203 = vmatprep.subr.bf16.mxu0 0
        %1204 = vmatpush1.bf16.msra.mxu0 0
        %1205 = vmatprep.subr.bf16.mxu0 0
        %1206 = vmatpush1.bf16.msra.mxu0 0
        %1207 = vmatprep.mubr.bf16.mxu0 0
        %1208 = vmatmul.mubr.bf16.gmra.mrb[0].mxu0 %v1170
        %v1209 = vpop.f32.mrb[0].mxu0
        %v1210 = vadd.f32 0.0, %v1209
        %v1211 = vpop.f32.mrb[0].mxu0
        %v1212 = vpop.f32.mrb[0].mxu0
        %v1213 = vpop.f32.mrb[0].mxu0
        %1214 = vdwg.mxu0
        %v1215 = vpack.c.bf16 %v1210, %v1210
        %v1217 = vsel %vm632, %v1215, 0
        %v1220 = vsel %vm694, %v443, 0
        %1222 = vmatprep.subr.bf16.mxu0 0
        %1223 = vmatpush1.bf16.msra.mxu0 %v1220
        %1224 = vmatprep.subr.bf16.mxu0 0
        %1225 = vmatpush1.bf16.msra.mxu0 0
        %1226 = vmatprep.subr.bf16.mxu0 0
        %1227 = vmatpush1.bf16.msra.mxu0 0
        %1228 = vmatprep.subr.bf16.mxu0 0
        %1229 = vmatpush1.bf16.msra.mxu0 0
        %1230 = vmatprep.subr.bf16.mxu0 0
        %1231 = vmatpush1.bf16.msra.mxu0 0
        %1232 = vmatprep.subr.bf16.mxu0 0
        %1233 = vmatpush1.bf16.msra.mxu0 0
        %1234 = vmatprep.subr.bf16.mxu0 0
        %1235 = vmatpush1.bf16.msra.mxu0 0
        %1236 = vmatprep.subr.bf16.mxu0 0
        %1237 = vmatpush1.bf16.msra.mxu0 0
        %1238 = vmatprep.subr.bf16.mxu0 0
        %1239 = vmatpush1.bf16.msra.mxu0 0
        %1240 = vmatprep.subr.bf16.mxu0 0
        %1241 = vmatpush1.bf16.msra.mxu0 0
        %1242 = vmatprep.subr.bf16.mxu0 0
        %1243 = vmatpush1.bf16.msra.mxu0 0
        %1244 = vmatprep.subr.bf16.mxu0 0
        %1245 = vmatpush1.bf16.msra.mxu0 0
        %1246 = vmatprep.subr.bf16.mxu0 0
        %1247 = vmatpush1.bf16.msra.mxu0 0
        %1248 = vmatprep.subr.bf16.mxu0 0
        %1249 = vmatpush1.bf16.msra.mxu0 0
        %1250 = vmatprep.subr.bf16.mxu0 0
        %1251 = vmatpush1.bf16.msra.mxu0 0
        %1252 = vmatprep.subr.bf16.mxu0 0
        %1253 = vmatpush1.bf16.msra.mxu0 0
        %1254 = vmatprep.mubr.bf16.mxu0 0
        %1255 = vmatmul.mubr.bf16.gmra.mrb[0].mxu0 %v1217
        %v1256 = vpop.f32.mrb[0].mxu0
        %v1257 = vadd.f32 0.0, %v1256
        %v1258 = vpop.f32.mrb[0].mxu0
        %v1259 = vpop.f32.mrb[0].mxu0
        %v1260 = vpop.f32.mrb[0].mxu0
        %1261 = vdwg.mxu0
        %v1262 = vadd.f32 %v1104, %v1257
        %1263 = vst.msk [vmem:[%s435] sm:$0xff] %vm460, %v1262
        %s1264 = sand.u32 %s221, 1
        %s1265 = scalar_lea.sflag [#allocation4], %s1264
        %s1266 = sand.u32 %s221, 1
        %s1267 = smul.addr %s1266, 8
        %s1268 = scalar_lea.vmem [#allocation13], %s1267
        // Predicated region
        $region77: #{tpu_custom_call.1} parent=51 // pred_check
          %p1269 = pneg %p231
        $region78: #{tpu_custom_call.1} parent=51 // pred_check_branch
          %1271 = sbr.rel (%p1269) target = $region80
        $region79: #{tpu_custom_call.1} parent=51 // pred_region
          %s1273 = ssub.s32 128, 128
          %1274 = vsyncadd %s1265, %s1273
          %s1275 = smul.addr %s30, 128
          %s1276 = scalar_lea.hbm %s8, %s1275
          %s1278 = sshll.u32 %s1268, 4
          %s1279 = int_to_ptr.vmem [resolvable:$true] %s1278
          %1281 = dma.vmem_to_hbm [thread:$0]  %s1279, 128, %s1276, %s1265
        $region80: #{tpu_custom_call.1} parent=51 // pred_fallthru
          _
      $region52: #{tpu_custom_call.1} parent=5 // pred_fallthru
        _
      %p1282 = scmp.le.s32.totalorder 2, %s25
      // Predicated region
      $region81: #{tpu_custom_call.1} parent=5 // pred_check
        %p1283 = pneg %p1282
      $region82: #{tpu_custom_call.1} parent=5 // pred_check_branch
        %1285 = sbr.rel (%p1283) target = $region84
      $region83: #{tpu_custom_call.1} parent=5 // pred_region
        %s1286 = ssub.s32 %s25, 2
        // Predicated region
        $region85: #{tpu_custom_call.1} parent=83 // pred_check
          %p1287 = pneg %p237
        $region86: #{tpu_custom_call.1} parent=83 // pred_check_branch
          %1289 = sbr.rel (%p1287) target = $region88
        $region87: #{tpu_custom_call.1} parent=83 // pred_region
          %s1290 = sand.u32 %s222, 1
          %s1291 = scalar_lea.sflag [#allocation4], %s1290
          %s1292 = sand.u32 %s222, 1
          %s1293 = smul.addr %s1292, 8
          %s1294 = scalar_lea.vmem [#allocation13], %s1293
          %1295 = dma.done %s1291, 128
        $region88: #{tpu_custom_call.1} parent=83 // pred_fallthru
          _
      $region84: #{tpu_custom_call.1} parent=5 // pred_fallthru
        _
    $region6: #{tpu_custom_call.1} parent=1 // loop_footer
      %s29 = sadd.s32 1, %s25
    $region7: #{tpu_custom_call.1} parent=1 // loop_footer_branch
      %24 = sbr.rel target = $region3
    $region8: #{tpu_custom_call.1} parent=1 // loop_exit
      _
    %1296 = vsyncpa [#allocation3], 1
    %s1297 = scalar_lea.sflag [#allocation3], 1
    %1298 = vsyncpa %s1297, 1
    %1299 = vsyncpa [#allocation6], 1
    %s1300 = scalar_lea.sflag [#allocation6], 1
    %1301 = vsyncpa %s1300, 1
    %1302 = vsyncpa [#allocation9], 1
    %1303 = vsyncpa [#allocation12], 1
    %1304 = vsyncpa [#allocation4], 1
    %s1305 = scalar_lea.sflag [#allocation4], 1
    %1306 = vsyncpa %s1305, 1

</llo_original>
